<compile_context>
chip_gen: v7x
topology: tpu7x:2x2x1
jax: 0.10.0
libtpu: 0.0.40
codegen_flags: <defaults>
</compile_context>

<pallas_src>
import functools

import jax
import jax.numpy as jnp
from jax import lax
from jax.experimental import pallas as pl
from jax.experimental.pallas import tpu as pltpu

EPS = 1e-5
LANE = 128


# ----------------------------------------------------------------------------
# Fused kernel body
# ----------------------------------------------------------------------------
def _bottleneck_kernel(x_hbm, w1_ref, b1_ref, w2_ref, b2_ref, w3_ref, b3_ref,
                       o_ref, xb, imcol, sem, *, th, d):
    # x_hbm : (N, H + 2d, W, Cp)  raw HBM ref (H zero-padded by the conv2 halo)
    # w1_ref: (Cp, Pp)  w2_ref: (3, 3*Pp, Pp)  w3_ref: (Pp, Cp)  (BN-scaled)
    # b*_ref: (1, Pp) / (1, Cp)  f32 folded BN biases
    # o_ref : (1, th, W, Cp) output tile
    # xb    : VMEM (2, th + 2d, W, Cp)  double-buffered x slab (with halo)
    # imcol : VMEM (th + 2d, W, 3*Pp)   width-im2col staging of conv1 output
    # sem   : DMA semaphores, one per xb slot
    n = pl.program_id(0)
    i = pl.program_id(1)
    num_i = pl.num_programs(1)
    ht = xb.shape[1]
    W = xb.shape[2]
    cin = xb.shape[3]
    pp = w1_ref.shape[-1]
    slot = i % 2

    def _start(row_tile, s):
        pltpu.make_async_copy(x_hbm.at[n, pl.ds(row_tile * th, ht)],
                              xb.at[s], sem.at[s]).start()

    # Prime the current slot on the first row tile of this image; for i > 0 the
    # previous step already issued our DMA.
    @pl.when(i == 0)
    def _():
        _start(0, slot)

    # Prefetch the next row tile (overlaps with this step's compute).
    @pl.when(i + 1 < num_i)
    def _():
        _start(i + 1, 1 - slot)

    # Wait for this step's slab only at point of use.
    pltpu.make_async_copy(x_hbm.at[n, pl.ds(i * th, ht)], xb.at[slot],
                          sem.at[slot]).wait()

    xv = xb[slot]                                     # (ht, W, cin)

    # conv1 (1x1) + bn1 + relu over the whole slab (halo rows included).
    y1 = jnp.dot(xv.reshape(ht * W, cin), w1_ref[...],
                 preferred_element_type=jnp.float32)
    y1 = jnp.maximum(y1 + b1_ref[...], 0.0).reshape(ht, W, pp)
    y1 = y1.astype(imcol.dtype)

    # Width-im2col staging: channel block [kx*pp:(kx+1)*pp] holds y1 shifted by
    # (kx - 1) * d columns.  The zero border stripes are written once per image
    # (i == 0) and never overwritten afterwards.
    @pl.when(i == 0)
    def _():
        imcol[:, 0:d, 0:pp] = jnp.zeros((ht, d, pp), imcol.dtype)
        imcol[:, W - d:W, 2 * pp:3 * pp] = jnp.zeros((ht, d, pp), imcol.dtype)

    imcol[:, d:W, 0:pp] = y1[:, 0:W - d, :]
    imcol[:, :, pp:2 * pp] = y1
    imcol[:, 0:W - d, 2 * pp:3 * pp] = y1[:, d:W, :]

    # Halo rows outside the image must contribute zeros to conv2 (their conv1
    # output is relu(b1), not zero).  Only boundary row tiles have such rows
    # (the wrapper guarantees th >= d), so no full-slab select on interior ones.
    @pl.when(i == 0)
    def _():
        imcol[0:d] = jnp.zeros((d, W, 3 * pp), imcol.dtype)

    @pl.when(i == num_i - 1)
    def _():
        imcol[ht - d:ht] = jnp.zeros((d, W, 3 * pp), imcol.dtype)

    # conv2 (3x3, dilation d) as 3 MXU matmuls with K = 3*pp (kx folded into
    # the contraction), + bn2 + relu.  Accumulator initialised with the first
    # tap (no zeros pass).
    z = jnp.dot(imcol[0:th].reshape(th * W, 3 * pp), w2_ref[0],
                preferred_element_type=jnp.float32)
    z = z + jnp.dot(imcol[d:d + th].reshape(th * W, 3 * pp), w2_ref[1],
                    preferred_element_type=jnp.float32)
    z = z + jnp.dot(imcol[2 * d:2 * d + th].reshape(th * W, 3 * pp), w2_ref[2],
                    preferred_element_type=jnp.float32)
    y2 = jnp.maximum(z + b2_ref[...], 0.0).astype(imcol.dtype)

    # conv3 (1x1) + bn3 + residual + relu -> the only HBM write.
    y3 = jnp.dot(y2, w3_ref[...], preferred_element_type=jnp.float32)
    res = xv[d:d + th].reshape(th * W, cin).astype(jnp.float32)
    y3 = jnp.maximum(y3 + b3_ref[...] + res, 0.0)
    o_ref[...] = y3.reshape(1, th, W, cin).astype(o_ref.dtype)


# ----------------------------------------------------------------------------
# Feature probe: single-buffered (Buffered(1)) constant blocks
# ----------------------------------------------------------------------------
_SINGLE_BUFFER_WEIGHTS = None  # resolved lazily, OUTSIDE any trace


def _probe_single_buffer_weights():
    """Check (with a tiny real pallas_call) that pipeline_mode=pl.Buffered(1)
    is supported; falls back to default double-buffering otherwise."""
    try:
        def _copy(x_ref, o_ref):
            o_ref[...] = x_ref[...] + 1.0

        spec = pl.BlockSpec((8, 128), lambda i: (0, 0),
                            pipeline_mode=pl.Buffered(1))
        f = pl.pallas_call(
            _copy,
            out_shape=jax.ShapeDtypeStruct((8, 128), jnp.float32),
            grid=(2,),
            in_specs=[spec],
            out_specs=pl.BlockSpec((8, 128), lambda i: (0, 0)),
        )
        y = jax.block_until_ready(f(jnp.zeros((8, 128), jnp.float32)))
        return bool(jnp.all(y == 1.0))
    except Exception:
        return False


def resolve_weight_buffering():
    """Resolve the Buffered(1) probe.  Must be called outside jit tracing."""
    global _SINGLE_BUFFER_WEIGHTS
    if _SINGLE_BUFFER_WEIGHTS is None:
        _SINGLE_BUFFER_WEIGHTS = _probe_single_buffer_weights()
    return _SINGLE_BUFFER_WEIGHTS


# ----------------------------------------------------------------------------
# VMEM budgeting / tiling
# ----------------------------------------------------------------------------
def _round_up(x, m):
    return (x + m - 1) // m * m


def _vmem_budget_bytes():
    # Raise the scoped VMEM limit above the conservative default but keep
    # headroom below physical capacity (128 MiB on v5e/v6e, 64 MiB/core v7x).
    try:
        cap = int(pltpu.get_tpu_info().vmem_capacity_bytes)
    except Exception:
        cap = 64 * 1024 * 1024  # conservative fallback (v7x per-core VMEM)
    return min(int(cap * 0.75), 100 * 1024 * 1024)


def _tile_vmem_bytes(th, W, d, Cp, Pp, itemsize, weight_buffers):
    """Working-set estimate for one row tile, including the f32 epilogue
    temporaries (y3 / residual) that the previous estimate omitted."""
    ht = th + 2 * d
    w_bytes = weight_buffers * (Cp * Pp + 9 * Pp * Pp + Pp * Cp) * itemsize
    b_bytes = weight_buffers * (2 * Pp + Cp) * 4
    xb = 2 * ht * W * Cp * itemsize              # double-buffered x slab
    imc = ht * W * 3 * Pp * itemsize             # width-im2col staging
    out = 2 * th * W * Cp * itemsize             # double-buffered out tile
    f32 = 4 * (ht * W * Pp                       # y1
               + th * W * Pp                     # conv2 accumulator
               + 2 * th * W * Cp)                # y3 + residual epilogue temps
    return w_bytes + b_bytes + xb + imc + out + f32


def _choose_row_tile(H, W, d, Cp, Pp, itemsize, budget_bytes, *,
                     weight_buffers, max_row_tile=None):
    """Largest divisor of H (>= d, so halo zeroing is boundary-tile only) whose
    working set fits the VMEM budget.  Only the batch axis is megacore
    "parallel" (the row axis carries the DMA prefetch chain and stays
    "arbitrary"), so a bigger row tile is strictly better: fewer grid steps and
    a larger matmul M."""
    divs = [t for t in range(H, 0, -1) if H % t == 0 and t >= min(d, H)]
    if max_row_tile is not None:
        limited = [t for t in divs if t <= max_row_tile]
        divs = limited or divs
    if not divs:
        divs = [H]
    for t in divs:
        if _tile_vmem_bytes(t, W, d, Cp, Pp, itemsize,
                            weight_buffers) <= budget_bytes:
            return t
    return divs[-1]


# ----------------------------------------------------------------------------
# pallas_call wrapper
# ----------------------------------------------------------------------------
def _fused_bottleneck_call(x_p, w1, b1, w2, b2, w3, b3, *, W, th, d,
                           out_dtype, vmem_limit, single_buffer_weights):
    N, H_pad, _, Cp = x_p.shape
    Pp = w1.shape[-1]
    H = H_pad - 2 * d
    ht = th + 2 * d
    kernel = functools.partial(_bottleneck_kernel, th=th, d=d)

    def const_spec(shape):
        index_map = lambda n, i: (0,) * len(shape)
        if single_buffer_weights:
            # Weights never change: a single pipeline buffer halves their VMEM.
            return pl.BlockSpec(shape, index_map, pipeline_mode=pl.Buffered(1))
        return pl.BlockSpec(shape, index_map)

    return pl.pallas_call(
        kernel,
        out_shape=jax.ShapeDtypeStruct((N, H, W, Cp), out_dtype),
        grid=(N, H // th),
        in_specs=[
            pl.BlockSpec(memory_space=pl.ANY),      # x: manual halo DMA
            const_spec((Cp, Pp)),                   # w1 (BN1-scaled)
            const_spec((1, Pp)),                    # b1
            const_spec((3, 3 * Pp, Pp)),            # w2 (kx folded into K)
            const_spec((1, Pp)),                    # b2
            const_spec((Pp, Cp)),                   # w3 (BN3-scaled)
            const_spec((1, Cp)),                    # b3
        ],
        out_specs=pl.BlockSpec((1, th, W, Cp), lambda n, i: (n, i, 0, 0)),
        scratch_shapes=[
            pltpu.VMEM((2, ht, W, Cp), x_p.dtype),   # double-buffered x slab
            pltpu.VMEM((ht, W, 3 * Pp), x_p.dtype),  # width-im2col staging
            pltpu.SemaphoreType.DMA((2,)),
        ],
        compiler_params=pltpu.CompilerParams(
            # The row-tile axis must stay "arbitrary": the manual x-slab DMA is
            # chained across consecutive i steps (prefetch of i+1 issued at i).
            # The batch axis is "parallel" so both v7x TensorCores get images.
            dimension_semantics=("parallel", "arbitrary"),
            vmem_limit_bytes=int(vmem_limit)),
    )(x_p, w1, b1, w2, b2, w3, b3)


def _fold_bn(gamma, beta, mean, var):
    scale = gamma / jnp.sqrt(var + EPS)
    bias = beta - mean * scale
    return scale, bias


def bottleneck_forward(x_nchw, params, *, stride=1, dilation=1,
                       compute_dtype=jnp.bfloat16, max_row_tile=None,
                       single_buffer_weights=None):
    """Fused Pallas forward of Bottleneck (downsample=None, eval-mode BN).

    compute_dtype defaults to bfloat16 (f32 accumulation + f32 epilogue);
    pass jnp.float32 or None for full-precision staging."""
    assert stride == 1, "stride != 1 requires the downsample branch"
    d = int(dilation)
    assert d >= 1

    if single_buffer_weights is None:
        single_buffer_weights = bool(_SINGLE_BUFFER_WEIGHTS)

    # NCHW -> NHWC.  TODO(synk): keep the surrounding model NHWC end-to-end to
    # drop this transpose (and the inverse below) -- each is a full-array HBM
    # round trip done by XLA outside the kernel.
    x = jnp.transpose(x_nchw, (0, 2, 3, 1))
    N, H, W, Cin = x.shape
    assert d < W and d <= H, "dilation must be smaller than the spatial size"
    P = params["w1"].shape[1]
    assert params["w1"].shape == (Cin, P) and params["w3"].shape == (P, Cin)
    assert Cin == 4 * P, "downsample=None requires inplanes == planes * 4"

    s1, b1 = _fold_bn(*params["bn1"])
    s2, b2 = _fold_bn(*params["bn2"])
    s3, b3 = _fold_bn(*params["bn3"])

    # Fold BN scale into the conv weights; only "+bias" stays in-kernel.
    w1 = params["w1"] * s1[None, :]
    w2 = params["w2"] * s2[None, None, None, :]
    w3 = params["w3"] * s3[None, :]

    # Lane-dense channel padding (multiples of 128): unmasked vector stores and
    # better MXU N-utilisation.  Padded channels stay exactly zero end-to-end.
    Cp = _round_up(Cin, LANE)
    Pp = _round_up(P, LANE)
    w1 = jnp.pad(w1, ((0, Cp - Cin), (0, Pp - P)))
    w2 = jnp.pad(w2, ((0, 0), (0, 0), (0, Pp - P), (0, Pp - P)))
    w3 = jnp.pad(w3, ((0, Pp - P), (0, Cp - Cin)))
    # Fold the kx taps into the matmul contraction: (3,3,Pp,Pp) -> (3, 3*Pp, Pp)
    # matching the in-kernel width-im2col channel layout [kx*Pp + cin].
    w2 = w2.reshape(3, 3 * Pp, Pp)
    b1p = jnp.pad(b1, (0, Pp - P)).reshape(1, Pp).astype(jnp.float32)
    b2p = jnp.pad(b2, (0, Pp - P)).reshape(1, Pp).astype(jnp.float32)
    b3p = jnp.pad(b3, (0, Cp - Cin)).reshape(1, Cp).astype(jnp.float32)

    # Channel pad + conv2 halo (d zero rows at the top/bottom of H).
    # TODO(synk): the halo rows could be handled in-kernel (clamped DMA + the
    # existing boundary-row zeroing) to drop this extra HBM copy.
    x_p = jnp.pad(x, ((0, 0), (d, d), (0, 0), (0, Cp - Cin)))

    if compute_dtype is not None:  # bf16 default: halves HBM/VMEM traffic
        x_p = x_p.astype(compute_dtype)
        w1, w2, w3 = (w1.astype(compute_dtype), w2.astype(compute_dtype),
                      w3.astype(compute_dtype))

    itemsize = jnp.dtype(x_p.dtype).itemsize
    vmem_limit = _vmem_budget_bytes()
    th = _choose_row_tile(H, W, d, Cp, Pp, itemsize, int(0.8 * vmem_limit),
                          weight_buffers=1 if single_buffer_weights else 2,
                          max_row_tile=max_row_tile)

    y = _fused_bottleneck_call(x_p, w1, b1p, w2, b2p, w3, b3p,
                               W=W, th=th, d=d, out_dtype=x_nchw.dtype,
                               vmem_limit=vmem_limit,
                               single_buffer_weights=single_buffer_weights)
    return jnp.transpose(y[..., :Cin], (0, 3, 1, 2))  # NHWC -> NCHW


# ----------------------------------------------------------------------------
# Pure-JAX reference (correctness check only)
# ----------------------------------------------------------------------------
def bottleneck_reference(x_nchw, params, *, stride=1, dilation=1):
    x = jnp.transpose(x_nchw, (0, 2, 3, 1))
    Cin = x.shape[-1]
    P = params["w1"].shape[1]

    def bn(y, g, b, m, v):
        return (y - m) / jnp.sqrt(v + EPS) * g + b

    dn = ("NHWC", "HWIO", "NHWC")
    out = lax.conv_general_dilated(
        x, params["w1"].reshape(1, 1, Cin, P), (1, 1), "VALID",
        dimension_numbers=dn)
    out = jax.nn.relu(bn(out, *params["bn1"]))
    out = lax.conv_general_dilated(
        out, params["w2"], (stride, stride),
        ((dilation, dilation), (dilation, dilation)),
        rhs_dilation=(dilation, dilation), dimension_numbers=dn)
    out = jax.nn.relu(bn(out, *params["bn2"]))
    out = lax.conv_general_dilated(
        out, params["w3"].reshape(1, 1, P, Cin), (1, 1), "VALID",
        dimension_numbers=dn)
    out = bn(out, *params["bn3"])
    out = jax.nn.relu(out + x)
    return jnp.transpose(out, (0, 3, 1, 2))


# ----------------------------------------------------------------------------
def make_params(key, inplanes, planes):
    expansion = 4
    outplanes = planes * expansion
    ks = jax.random.split(key, 6)

    def bn_params(k, c):
        k0, k1, k2, k3 = jax.random.split(k, 4)
        gamma = 1.0 + 0.1 * jax.random.normal(k0, (c,), jnp.float32)
        beta = 0.05 * jax.random.normal(k1, (c,), jnp.float32)
        mean = 0.1 * jax.random.normal(k2, (c,), jnp.float32)
        var = 0.5 + jnp.abs(jax.random.normal(k3, (c,), jnp.float32)) * 0.5
        return (gamma, beta, mean, var)

    return {
        # conv weights stored channels-last / HWIO-style
        "w1": 0.1 * jax.random.normal(ks[0], (inplanes, planes), jnp.float32),
        "w2": 0.1 * jax.random.normal(ks[1], (3, 3, planes, planes), jnp.float32),
        "w3": 0.1 * jax.random.normal(ks[2], (planes, outplanes), jnp.float32),
        "bn1": bn_params(ks[3], planes),
        "bn2": bn_params(ks[4], planes),
        "bn3": bn_params(ks[5], outplanes),
    }


if __name__ == "__main__":
    # Resolve the Buffered(1) feature probe outside of any jit trace.
    resolve_weight_buffering()

    key = jax.random.PRNGKey(0)
    k_x, k_p = jax.random.split(key)

    N, H, W = 2, 16, 16
    planes = 4
    inplanes = planes * 4          # downsample=None => inplanes == planes * 4
    x = jax.random.normal(k_x, (N, inplanes, H, W), jnp.float32)  # NCHW
    params = make_params(k_p, inplanes, planes)

    ref1 = jax.block_until_ready(
        bottleneck_reference(x, params, stride=1, dilation=1))
    ref2 = jax.block_until_ready(
        bottleneck_reference(x, params, stride=1, dilation=2))

    # f32, dilation=1, several row tiles (exercises the cross-step DMA chain).
    fwd = jax.jit(functools.partial(
        bottleneck_forward, stride=1, dilation=1,
        compute_dtype=jnp.float32, max_row_tile=4))
    out = jax.block_until_ready(fwd(x, params))
    assert out.shape == (N, inplanes, H, W), out.shape
    assert jnp.allclose(out, ref1, atol=1e-4, rtol=1e-4), \
        float(jnp.max(jnp.abs(out - ref1)))

    # f32, dilation=2 (2-row halo) with 2 row tiles.
    fwd2 = jax.jit(functools.partial(
        bottleneck_forward, stride=1, dilation=2,
        compute_dtype=jnp.float32, max_row_tile=8))
    out2 = jax.block_until_ready(fwd2(x, params))
    assert jnp.allclose(out2, ref2, atol=1e-4, rtol=1e-4), \
        float(jnp.max(jnp.abs(out2 - ref2)))

    # f32, single row tile (th == H) -- degenerate pipeline path.
    fwd3 = jax.jit(functools.partial(
        bottleneck_forward, stride=1, dilation=1, compute_dtype=jnp.float32))
    out3 = jax.block_until_ready(fwd3(x, params))
    assert jnp.allclose(out3, ref1, atol=1e-4, rtol=1e-4), \
        float(jnp.max(jnp.abs(out3 - ref1)))

    # Default path: bf16 staging (f32 accumulate + f32 epilogue), loose check.
    fwd_bf16 = jax.jit(functools.partial(bottleneck_forward, stride=1, dilation=1))
    out_bf16 = jax.block_until_ready(fwd_bf16(x, params))
    assert jnp.allclose(out_bf16, ref1, atol=1e-1, rtol=1e-1), \
        float(jnp.max(jnp.abs(out_bf16 - ref1)))

    print("KERNEL_OK")
</pallas_src>

<mosaic_0001>
module attributes {stable_mosaic.version = 11 : i64} {
  func.func @_copy(%arg0: i32, %arg1: memref<8x128xf32, #tpu.memory_space<vmem>>, %arg2: memref<8x128xf32, #tpu.memory_space<vmem>>) attributes {dimension_semantics = [#tpu.dimension_semantics<arbitrary>], iteration_bounds = array<i64: 2>, scalar_prefetch = 0 : i64, scratch_operands = 0 : i64, tpu.core_type = #tpu.core_type<tc>, window_params = [{pipeline_mode = #tpu.pipeline_mode<synchronous>, transform_indices = @transform_0, window_bounds = array<i64: 8, 128>}, {pipeline_mode = #tpu.pipeline_mode<synchronous>, transform_indices = @transform_1, window_bounds = array<i64: 8, 128>}]} {
    %c0 = arith.constant 0 : index
    %c0_0 = arith.constant 0 : index
    %0 = vector.load %arg1[%c0, %c0_0] : memref<8x128xf32, #tpu.memory_space<vmem>>, vector<8x128xf32>
    %cst = arith.constant 1.000000e+00 : f32
    %1 = vector.broadcast %cst : f32 to vector<8x128xf32>
    %2 = arith.addf %0, %1 : vector<8x128xf32>
    %c0_1 = arith.constant 0 : index
    %c0_2 = arith.constant 0 : index
    %3 = vector.load %arg2[%c0_1, %c0_2] : memref<8x128xf32, #tpu.memory_space<vmem>>, vector<8x128xf32>
    tpu.vector_store %arg2[%c0_1, %c0_2], %2 {strides = array<i32>} : memref<8x128xf32, #tpu.memory_space<vmem>>, vector<8x128xf32>,
    return
  }
  func.func @transform_0(%arg0: i32) -> (i32, i32) {
    %c0_i32 = arith.constant 0 : i32
    %c0_i32_0 = arith.constant 0 : i32
    %c0_i32_1 = arith.constant 0 : i32
    return %c0_i32, %c0_i32_0 : i32, i32
  }
  func.func @transform_1(%arg0: i32) -> (i32, i32) {
    %c0_i32 = arith.constant 0 : i32
    %c0_i32_0 = arith.constant 0 : i32
    %c0_i32_1 = arith.constant 0 : i32
    return %c0_i32, %c0_i32_0 : i32, i32
  }
}

module attributes {stable_mosaic.version = 11 : i64} {
  func.func @_bottleneck_kernel(%arg0: i32, %arg1: i32, %arg2: memref<2x18x16x128xf32, #tpu.memory_space<any>>, %arg3: memref<128x128xf32, #tpu.memory_space<vmem>>, %arg4: memref<1x128xf32, #tpu.memory_space<vmem>>, %arg5: memref<3x384x128xf32, #tpu.memory_space<vmem>>, %arg6: memref<1x128xf32, #tpu.memory_space<vmem>>, %arg7: memref<128x128xf32, #tpu.memory_space<vmem>>, %arg8: memref<1x128xf32, #tpu.memory_space<vmem>>, %arg9: memref<1x4x16x128xf32, #tpu.memory_space<vmem>>, %arg10: memref<2x6x16x128xf32, #tpu.memory_space<vmem>>, %arg11: memref<6x16x384xf32, #tpu.memory_space<vmem>>, %arg12: memref<2x!tpu.dma_semaphore, #tpu.memory_space<semaphore_mem>>) attributes {dimension_semantics = [#tpu.dimension_semantics<parallel>, #tpu.dimension_semantics<arbitrary>], iteration_bounds = array<i64: 2, 4>, scalar_prefetch = 0 : i64, scratch_operands = 3 : i64, tpu.core_type = #tpu.core_type<tc>, window_params = [{}, {pipeline_mode = #tpu.pipeline_mode<synchronous>, transform_indices = @transform_1, window_bounds = array<i64: 128, 128>}, {pipeline_mode = #tpu.pipeline_mode<synchronous>, transform_indices = @transform_2, window_bounds = array<i64: 1, 128>}, {pipeline_mode = #tpu.pipeline_mode<synchronous>, transform_indices = @transform_3, window_bounds = array<i64: 3, 384, 128>}, {pipeline_mode = #tpu.pipeline_mode<synchronous>, transform_indices = @transform_4, window_bounds = array<i64: 1, 128>}, {pipeline_mode = #tpu.pipeline_mode<synchronous>, transform_indices = @transform_5, window_bounds = array<i64: 128, 128>}, {pipeline_mode = #tpu.pipeline_mode<synchronous>, transform_indices = @transform_6, window_bounds = array<i64: 1, 128>}, {transform_indices = @transform_7, window_bounds = array<i64: 1, 4, 16, 128>}]} {
    %c2_i32 = arith.constant 2 : i32
    %c0_i32 = arith.constant 0 : i32
    %0 = arith.cmpi eq, %c2_i32, %c0_i32 : i32
    %c1_i32 = arith.constant 1 : i32
    %1 = arith.select %0, %c1_i32, %c2_i32 : i32
    %2 = arith.remsi %arg1, %1 : i32
    %c0_i32_0 = arith.constant 0 : i32
    %3 = arith.cmpi ne, %2, %c0_i32_0 : i32
    %c0_i32_1 = arith.constant 0 : i32
    %4 = arith.cmpi slt, %2, %c0_i32_1 : i32
    %c0_i32_2 = arith.constant 0 : i32
    %5 = arith.cmpi slt, %1, %c0_i32_2 : i32
    %6 = arith.xori %4, %5 : i1
    %7 = arith.andi %6, %3 : i1
    %8 = arith.addi %2, %1 : i32
    %9 = arith.select %7, %8, %2 : i32
    %c0_i32_3 = arith.constant 0 : i32
    %10 = arith.cmpi eq, %arg1, %c0_i32_3 : i32
    %11 = arith.extui %10 : i1 to i32
    %c0_i32_4 = arith.constant 0 : i32
    %12 = arith.cmpi ne, %11, %c0_i32_4 : i32
    scf.if %12 {
      %c0_i32_64 = arith.constant 0 : i32
      %c0_i32_65 = arith.constant 0 : i32
      %c0_i32_66 = arith.constant 0 : i32
      %84 = tpu.memref_slice %arg2[%arg0, %c0_i32_64, %c0_i32_65, %c0_i32_66] : memref<2x18x16x128xf32, #tpu.memory_space<any>> -> memref<1x6x16x128xf32, #tpu.memory_space<any>>
      %85 = tpu.memref_squeeze %84 : memref<1x6x16x128xf32, #tpu.memory_space<any>> -> memref<6x16x128xf32, #tpu.memory_space<any>>
      %c0_i32_67 = arith.constant 0 : i32
      %c0_i32_68 = arith.constant 0 : i32
      %c0_i32_69 = arith.constant 0 : i32
      %86 = tpu.memref_slice %arg10[%9, %c0_i32_67, %c0_i32_68, %c0_i32_69] : memref<2x6x16x128xf32, #tpu.memory_space<vmem>> -> memref<1x6x16x128xf32, #tpu.memory_space<vmem>>
      %87 = tpu.memref_squeeze %86 : memref<1x6x16x128xf32, #tpu.memory_space<vmem>> -> memref<6x16x128xf32, #tpu.memory_space<vmem>>
      %88 = tpu.memref_slice %arg12[%9] : memref<2x!tpu.dma_semaphore, #tpu.memory_space<semaphore_mem>> -> memref<1x!tpu.dma_semaphore, #tpu.memory_space<semaphore_mem>>
      %89 = tpu.memref_squeeze %88 : memref<1x!tpu.dma_semaphore, #tpu.memory_space<semaphore_mem>> -> memref<!tpu.dma_semaphore, #tpu.memory_space<semaphore_mem>>
      tpu.enqueue_dma source(%85 : memref<6x16x128xf32, #tpu.memory_space<any>>) target(%87 : memref<6x16x128xf32, #tpu.memory_space<vmem>>) target_semaphore(%89 : memref<!tpu.dma_semaphore, #tpu.memory_space<semaphore_mem>>)
    } else {
    }
    %c1_i32_5 = arith.constant 1 : i32
    %13 = arith.addi %arg1, %c1_i32_5 : i32
    %c4_i32 = arith.constant 4 : i32
    %14 = arith.cmpi slt, %13, %c4_i32 : i32
    %15 = arith.extui %14 : i1 to i32
    %c0_i32_6 = arith.constant 0 : i32
    %16 = arith.cmpi ne, %15, %c0_i32_6 : i32
    scf.if %16 {
      %c1_i32_64 = arith.constant 1 : i32
      %84 = arith.addi %arg1, %c1_i32_64 : i32
      %c1_i32_65 = arith.constant 1 : i32
      %85 = arith.subi %c1_i32_65, %9 : i32
      %c4_i32_66 = arith.constant 4 : i32
      %86 = arith.muli %84, %c4_i32_66 : i32
      %c0_i32_67 = arith.constant 0 : i32
      %c0_i32_68 = arith.constant 0 : i32
      %87 = tpu.memref_slice %arg2[%arg0, %86, %c0_i32_67, %c0_i32_68] : memref<2x18x16x128xf32, #tpu.memory_space<any>> -> memref<1x6x16x128xf32, #tpu.memory_space<any>>
      %88 = tpu.memref_squeeze %87 : memref<1x6x16x128xf32, #tpu.memory_space<any>> -> memref<6x16x128xf32, #tpu.memory_space<any>>
      %c0_i32_69 = arith.constant 0 : i32
      %c0_i32_70 = arith.constant 0 : i32
      %c0_i32_71 = arith.constant 0 : i32
      %89 = tpu.memref_slice %arg10[%85, %c0_i32_69, %c0_i32_70, %c0_i32_71] : memref<2x6x16x128xf32, #tpu.memory_space<vmem>> -> memref<1x6x16x128xf32, #tpu.memory_space<vmem>>
      %90 = tpu.memref_squeeze %89 : memref<1x6x16x128xf32, #tpu.memory_space<vmem>> -> memref<6x16x128xf32, #tpu.memory_space<vmem>>
      %91 = tpu.memref_slice %arg12[%85] : memref<2x!tpu.dma_semaphore, #tpu.memory_space<semaphore_mem>> -> memref<1x!tpu.dma_semaphore, #tpu.memory_space<semaphore_mem>>
      %92 = tpu.memref_squeeze %91 : memref<1x!tpu.dma_semaphore, #tpu.memory_space<semaphore_mem>> -> memref<!tpu.dma_semaphore, #tpu.memory_space<semaphore_mem>>
      tpu.enqueue_dma source(%88 : memref<6x16x128xf32, #tpu.memory_space<any>>) target(%90 : memref<6x16x128xf32, #tpu.memory_space<vmem>>) target_semaphore(%92 : memref<!tpu.dma_semaphore, #tpu.memory_space<semaphore_mem>>)
    } else {
    }
    %c4_i32_7 = arith.constant 4 : i32
    %17 = arith.muli %arg1, %c4_i32_7 : i32
    %c0_i32_8 = arith.constant 0 : i32
    %c0_i32_9 = arith.constant 0 : i32
    %18 = tpu.memref_slice %arg2[%arg0, %17, %c0_i32_8, %c0_i32_9] : memref<2x18x16x128xf32, #tpu.memory_space<any>> -> memref<1x6x16x128xf32, #tpu.memory_space<any>>
    %19 = tpu.memref_squeeze %18 : memref<1x6x16x128xf32, #tpu.memory_space<any>> -> memref<6x16x128xf32, #tpu.memory_space<any>>
    %c0_i32_10 = arith.constant 0 : i32
    %c0_i32_11 = arith.constant 0 : i32
    %c0_i32_12 = arith.constant 0 : i32
    %20 = tpu.memref_slice %arg10[%9, %c0_i32_10, %c0_i32_11, %c0_i32_12] : memref<2x6x16x128xf32, #tpu.memory_space<vmem>> -> memref<1x6x16x128xf32, #tpu.memory_space<vmem>>
    %21 = tpu.memref_squeeze %20 : memref<1x6x16x128xf32, #tpu.memory_space<vmem>> -> memref<6x16x128xf32, #tpu.memory_space<vmem>>
    %22 = tpu.memref_slice %arg12[%9] : memref<2x!tpu.dma_semaphore, #tpu.memory_space<semaphore_mem>> -> memref<1x!tpu.dma_semaphore, #tpu.memory_space<semaphore_mem>>
    %23 = tpu.memref_squeeze %22 : memref<1x!tpu.dma_semaphore, #tpu.memory_space<semaphore_mem>> -> memref<!tpu.dma_semaphore, #tpu.memory_space<semaphore_mem>>
    tpu.wait_dma2 semaphore(%23 : memref<!tpu.dma_semaphore, #tpu.memory_space<semaphore_mem>>) src(%19 : memref<6x16x128xf32, #tpu.memory_space<any>>) dst(%21 : memref<6x16x128xf32, #tpu.memory_space<vmem>>)
    %24 = arith.index_cast %9 : i32 to index
    %c0 = arith.constant 0 : index
    %c0_13 = arith.constant 0 : index
    %c0_14 = arith.constant 0 : index
    %25 = vector.load %arg10[%24, %c0, %c0_13, %c0_14] : memref<2x6x16x128xf32, #tpu.memory_space<vmem>>, vector<1x6x16x128xf32>
    %26 = vector.shape_cast %25 : vector<1x6x16x128xf32> to vector<6x16x128xf32>
    %27 = vector.shape_cast %26 : vector<6x16x128xf32> to vector<96x128xf32>
    %c0_15 = arith.constant 0 : index
    %c0_16 = arith.constant 0 : index
    %28 = vector.load %arg3[%c0_15, %c0_16] : memref<128x128xf32, #tpu.memory_space<vmem>>, vector<128x128xf32>
    %cst = arith.constant dense<0.000000e+00> : vector<96x128xf32>
    %29 = tpu.matmul %27, %28, %cst {dimension_numbers = #tpu.dot_dimension_numbers<[1], [0], [0], [1], [0, 0, 1, 1], [], []>} : vector<96x128xf32>, vector<128x128xf32>, vector<96x128xf32> -> vector<96x128xf32>
    %c0_17 = arith.constant 0 : index
    %c0_18 = arith.constant 0 : index
    %30 = vector.load %arg4[%c0_17, %c0_18] : memref<1x128xf32, #tpu.memory_space<vmem>>, vector<1x128xf32>
    %31 = vector.broadcast %30 : vector<1x128xf32> to vector<96x128xf32>
    %32 = arith.addf %29, %31 : vector<96x128xf32>
    %cst_19 = arith.constant 0.000000e+00 : f32
    %33 = vector.broadcast %cst_19 : f32 to vector<96x128xf32>
    %34 = arith.maximumf %32, %33 : vector<96x128xf32>
    %35 = vector.shape_cast %34 : vector<96x128xf32> to vector<6x16x128xf32>
    %c0_i32_20 = arith.constant 0 : i32
    %36 = arith.cmpi eq, %arg1, %c0_i32_20 : i32
    %37 = arith.extui %36 : i1 to i32
    %c0_i32_21 = arith.constant 0 : i32
    %38 = arith.cmpi ne, %37, %c0_i32_21 : i32
    scf.if %38 {
      %cst_64 = arith.constant 0.000000e+00 : f32
      %84 = vector.broadcast %cst_64 : f32 to vector<6x1x128xf32>
      %c0_65 = arith.constant 0 : index
      %c0_66 = arith.constant 0 : index
      %c0_67 = arith.constant 0 : index
      %85 = vector.load %arg11[%c0_65, %c0_66, %c0_67] : memref<6x16x384xf32, #tpu.memory_space<vmem>>, vector<6x1x128xf32>
      tpu.vector_store %arg11[%c0_65, %c0_66, %c0_67], %84 {strides = array<i32>} : memref<6x16x384xf32, #tpu.memory_space<vmem>>, vector<6x1x128xf32>,
      %cst_68 = arith.constant 0.000000e+00 : f32
      %86 = vector.broadcast %cst_68 : f32 to vector<6x1x128xf32>
      %c0_69 = arith.constant 0 : index
      %c15 = arith.constant 15 : index
      %c256_70 = arith.constant 256 : index
      %87 = vector.load %arg11[%c0_69, %c15, %c256_70] : memref<6x16x384xf32, #tpu.memory_space<vmem>>, vector<6x1x128xf32>
      tpu.vector_store %arg11[%c0_69, %c15, %c256_70], %86 {strides = array<i32>} : memref<6x16x384xf32, #tpu.memory_space<vmem>>, vector<6x1x128xf32>,
    } else {
    }
    %39 = vector.extract_strided_slice %35 {offsets = [0, 0, 0], sizes = [6, 15, 128], strides = [1, 1, 1]} : vector<6x16x128xf32> to vector<6x15x128xf32>
    %c0_22 = arith.constant 0 : index
    %c1 = arith.constant 1 : index
    %c0_23 = arith.constant 0 : index
    %40 = vector.load %arg11[%c0_22, %c1, %c0_23] : memref<6x16x384xf32, #tpu.memory_space<vmem>>, vector<6x15x128xf32>
    tpu.vector_store %arg11[%c0_22, %c1, %c0_23], %39 {strides = array<i32>} : memref<6x16x384xf32, #tpu.memory_space<vmem>>, vector<6x15x128xf32>,
    %c0_24 = arith.constant 0 : index
    %c0_25 = arith.constant 0 : index
    %c128 = arith.constant 128 : index
    %41 = vector.load %arg11[%c0_24, %c0_25, %c128] : memref<6x16x384xf32, #tpu.memory_space<vmem>>, vector<6x16x128xf32>
    tpu.vector_store %arg11[%c0_24, %c0_25, %c128], %35 {strides = array<i32>} : memref<6x16x384xf32, #tpu.memory_space<vmem>>, vector<6x16x128xf32>,
    %42 = vector.extract_strided_slice %35 {offsets = [0, 1, 0], sizes = [6, 15, 128], strides = [1, 1, 1]} : vector<6x16x128xf32> to vector<6x15x128xf32>
    %c0_26 = arith.constant 0 : index
    %c0_27 = arith.constant 0 : index
    %c256 = arith.constant 256 : index
    %43 = vector.load %arg11[%c0_26, %c0_27, %c256] : memref<6x16x384xf32, #tpu.memory_space<vmem>>, vector<6x15x128xf32>
    tpu.vector_store %arg11[%c0_26, %c0_27, %c256], %42 {strides = array<i32>} : memref<6x16x384xf32, #tpu.memory_space<vmem>>, vector<6x15x128xf32>,
    %c0_i32_28 = arith.constant 0 : i32
    %44 = arith.cmpi eq, %arg1, %c0_i32_28 : i32
    %45 = arith.extui %44 : i1 to i32
    %c0_i32_29 = arith.constant 0 : i32
    %46 = arith.cmpi ne, %45, %c0_i32_29 : i32
    scf.if %46 {
      %cst_64 = arith.constant 0.000000e+00 : f32
      %84 = vector.broadcast %cst_64 : f32 to vector<1x16x384xf32>
      %c0_65 = arith.constant 0 : index
      %c0_66 = arith.constant 0 : index
      %c0_67 = arith.constant 0 : index
      %85 = vector.load %arg11[%c0_65, %c0_66, %c0_67] : memref<6x16x384xf32, #tpu.memory_space<vmem>>, vector<1x16x384xf32>
      tpu.vector_store %arg11[%c0_65, %c0_66, %c0_67], %84 {strides = array<i32>} : memref<6x16x384xf32, #tpu.memory_space<vmem>>, vector<1x16x384xf32>,
    } else {
    }
    %c3_i32 = arith.constant 3 : i32
    %47 = arith.cmpi eq, %arg1, %c3_i32 : i32
    %48 = arith.extui %47 : i1 to i32
    %c0_i32_30 = arith.constant 0 : i32
    %49 = arith.cmpi ne, %48, %c0_i32_30 : i32
    scf.if %49 {
      %cst_64 = arith.constant 0.000000e+00 : f32
      %84 = vector.broadcast %cst_64 : f32 to vector<1x16x384xf32>
      %c5 = arith.constant 5 : index
      %c0_65 = arith.constant 0 : index
      %c0_66 = arith.constant 0 : index
      %85 = vector.load %arg11[%c5, %c0_65, %c0_66] : memref<6x16x384xf32, #tpu.memory_space<vmem>>, vector<1x16x384xf32>
      tpu.vector_store %arg11[%c5, %c0_65, %c0_66], %84 {strides = array<i32>} : memref<6x16x384xf32, #tpu.memory_space<vmem>>, vector<1x16x384xf32>,
    } else {
    }
    %c0_31 = arith.constant 0 : index
    %c0_32 = arith.constant 0 : index
    %c0_33 = arith.constant 0 : index
    %50 = vector.load %arg11[%c0_31, %c0_32, %c0_33] : memref<6x16x384xf32, #tpu.memory_space<vmem>>, vector<4x16x384xf32>
    %51 = vector.shape_cast %50 : vector<4x16x384xf32> to vector<64x384xf32>
    %c0_34 = arith.constant 0 : index
    %c0_35 = arith.constant 0 : index
    %c0_36 = arith.constant 0 : index
    %52 = vector.load %arg5[%c0_34, %c0_35, %c0_36] : memref<3x384x128xf32, #tpu.memory_space<vmem>>, vector<1x384x128xf32>
    %53 = vector.shape_cast %52 : vector<1x384x128xf32> to vector<384x128xf32>
    %cst_37 = arith.constant dense<0.000000e+00> : vector<64x128xf32>
    %54 = tpu.matmul %51, %53, %cst_37 {dimension_numbers = #tpu.dot_dimension_numbers<[1], [0], [0], [1], [0, 0, 1, 1], [], []>} : vector<64x384xf32>, vector<384x128xf32>, vector<64x128xf32> -> vector<64x128xf32>
    %c1_38 = arith.constant 1 : index
    %c0_39 = arith.constant 0 : index
    %c0_40 = arith.constant 0 : index
    %55 = vector.load %arg11[%c1_38, %c0_39, %c0_40] : memref<6x16x384xf32, #tpu.memory_space<vmem>>, vector<4x16x384xf32>
    %56 = vector.shape_cast %55 : vector<4x16x384xf32> to vector<64x384xf32>
    %c1_41 = arith.constant 1 : index
    %c0_42 = arith.constant 0 : index
    %c0_43 = arith.constant 0 : index
    %57 = vector.load %arg5[%c1_41, %c0_42, %c0_43] : memref<3x384x128xf32, #tpu.memory_space<vmem>>, vector<1x384x128xf32>
    %58 = vector.shape_cast %57 : vector<1x384x128xf32> to vector<384x128xf32>
    %cst_44 = arith.constant dense<0.000000e+00> : vector<64x128xf32>
    %59 = tpu.matmul %56, %58, %cst_44 {dimension_numbers = #tpu.dot_dimension_numbers<[1], [0], [0], [1], [0, 0, 1, 1], [], []>} : vector<64x384xf32>, vector<384x128xf32>, vector<64x128xf32> -> vector<64x128xf32>
    %60 = arith.addf %54, %59 : vector<64x128xf32>
    %c2 = arith.constant 2 : index
    %c0_45 = arith.constant 0 : index
    %c0_46 = arith.constant 0 : index
    %61 = vector.load %arg11[%c2, %c0_45, %c0_46] : memref<6x16x384xf32, #tpu.memory_space<vmem>>, vector<4x16x384xf32>
    %62 = vector.shape_cast %61 : vector<4x16x384xf32> to vector<64x384xf32>
    %c2_47 = arith.constant 2 : index
    %c0_48 = arith.constant 0 : index
    %c0_49 = arith.constant 0 : index
    %63 = vector.load %arg5[%c2_47, %c0_48, %c0_49] : memref<3x384x128xf32, #tpu.memory_space<vmem>>, vector<1x384x128xf32>
    %64 = vector.shape_cast %63 : vector<1x384x128xf32> to vector<384x128xf32>
    %cst_50 = arith.constant dense<0.000000e+00> : vector<64x128xf32>
    %65 = tpu.matmul %62, %64, %cst_50 {dimension_numbers = #tpu.dot_dimension_numbers<[1], [0], [0], [1], [0, 0, 1, 1], [], []>} : vector<64x384xf32>, vector<384x128xf32>, vector<64x128xf32> -> vector<64x128xf32>
    %66 = arith.addf %60, %65 : vector<64x128xf32>
    %c0_51 = arith.constant 0 : index
    %c0_52 = arith.constant 0 : index
    %67 = vector.load %arg6[%c0_51, %c0_52] : memref<1x128xf32, #tpu.memory_space<vmem>>, vector<1x128xf32>
    %68 = vector.broadcast %67 : vector<1x128xf32> to vector<64x128xf32>
    %69 = arith.addf %66, %68 : vector<64x128xf32>
    %cst_53 = arith.constant 0.000000e+00 : f32
    %70 = vector.broadcast %cst_53 : f32 to vector<64x128xf32>
    %71 = arith.maximumf %69, %70 : vector<64x128xf32>
    %c0_54 = arith.constant 0 : index
    %c0_55 = arith.constant 0 : index
    %72 = vector.load %arg7[%c0_54, %c0_55] : memref<128x128xf32, #tpu.memory_space<vmem>>, vector<128x128xf32>
    %cst_56 = arith.constant dense<0.000000e+00> : vector<64x128xf32>
    %73 = tpu.matmul %71, %72, %cst_56 {dimension_numbers = #tpu.dot_dimension_numbers<[1], [0], [0], [1], [0, 0, 1, 1], [], []>} : vector<64x128xf32>, vector<128x128xf32>, vector<64x128xf32> -> vector<64x128xf32>
    %74 = vector.extract_strided_slice %26 {offsets = [1, 0, 0], sizes = [4, 16, 128], strides = [1, 1, 1]} : vector<6x16x128xf32> to vector<4x16x128xf32>
    %75 = vector.shape_cast %74 : vector<4x16x128xf32> to vector<64x128xf32>
    %c0_57 = arith.constant 0 : index
    %c0_58 = arith.constant 0 : index
    %76 = vector.load %arg8[%c0_57, %c0_58] : memref<1x128xf32, #tpu.memory_space<vmem>>, vector<1x128xf32>
    %77 = vector.broadcast %76 : vector<1x128xf32> to vector<64x128xf32>
    %78 = arith.addf %73, %77 : vector<64x128xf32>
    %79 = arith.addf %78, %75 : vector<64x128xf32>
    %cst_59 = arith.constant 0.000000e+00 : f32
    %80 = vector.broadcast %cst_59 : f32 to vector<64x128xf32>
    %81 = arith.maximumf %79, %80 : vector<64x128xf32>
    %82 = vector.shape_cast %81 : vector<64x128xf32> to vector<1x4x16x128xf32>
    %c0_60 = arith.constant 0 : index
    %c0_61 = arith.constant 0 : index
    %c0_62 = arith.constant 0 : index
    %c0_63 = arith.constant 0 : index
    %83 = vector.load %arg9[%c0_60, %c0_61, %c0_62, %c0_63] : memref<1x4x16x128xf32, #tpu.memory_space<vmem>>, vector<1x4x16x128xf32>
    tpu.vector_store %arg9[%c0_60, %c0_61, %c0_62, %c0_63], %82 {strides = array<i32>} : memref<1x4x16x128xf32, #tpu.memory_space<vmem>>, vector<1x4x16x128xf32>,
    return
  }
  func.func @transform_1(%arg0: i32, %arg1: i32) -> (i32, i32) {
    %c0_i32 = arith.constant 0 : i32
    %c0_i32_0 = arith.constant 0 : i32
    %c0_i32_1 = arith.constant 0 : i32
    return %c0_i32, %c0_i32_0 : i32, i32
  }
  func.func @transform_2(%arg0: i32, %arg1: i32) -> (i32, i32) {
    %c0_i32 = arith.constant 0 : i32
    %c0_i32_0 = arith.constant 0 : i32
    %c0_i32_1 = arith.constant 0 : i32
    return %c0_i32, %c0_i32_0 : i32, i32
  }
  func.func @transform_3(%arg0: i32, %arg1: i32) -> (i32, i32, i32) {
    %c0_i32 = arith.constant 0 : i32
    %c0_i32_0 = arith.constant 0 : i32
    %c0_i32_1 = arith.constant 0 : i32
    %c0_i32_2 = arith.constant 0 : i32
    return %c0_i32, %c0_i32_0, %c0_i32_1 : i32, i32, i32
  }
  func.func @transform_4(%arg0: i32, %arg1: i32) -> (i32, i32) {
    %c0_i32 = arith.constant 0 : i32
    %c0_i32_0 = arith.constant 0 : i32
    %c0_i32_1 = arith.constant 0 : i32
    return %c0_i32, %c0_i32_0 : i32, i32
  }
  func.func @transform_5(%arg0: i32, %arg1: i32) -> (i32, i32) {
    %c0_i32 = arith.constant 0 : i32
    %c0_i32_0 = arith.constant 0 : i32
    %c0_i32_1 = arith.constant 0 : i32
    return %c0_i32, %c0_i32_0 : i32, i32
  }
  func.func @transform_6(%arg0: i32, %arg1: i32) -> (i32, i32) {
    %c0_i32 = arith.constant 0 : i32
    %c0_i32_0 = arith.constant 0 : i32
    %c0_i32_1 = arith.constant 0 : i32
    return %c0_i32, %c0_i32_0 : i32, i32
  }
  func.func @transform_7(%arg0: i32, %arg1: i32) -> (i32, i32, i32, i32) {
    %c0_i32 = arith.constant 0 : i32
    %c0_i32_0 = arith.constant 0 : i32
    %c0_i32_1 = arith.constant 0 : i32
    return %arg0, %arg1, %c0_i32, %c0_i32_0 : i32, i32, i32, i32
  }
}

</mosaic_0001>

<llo_original>
// kernel: tpu_custom_call.1
$region0: #{tpu_custom_call.1}
  #allocation0 [shape = 'u32[]', space=smem, size = 0x4, offset = 0x4, fixed_abs, tag = 'smem constant byte address 0x4 - core index']
  #allocation1 [shape = 'u32[144,128]{1,0:T(1,128)}', space=vmem, size = 0x12000, scoped, tag = 'internal scratch']
  %s0 = inlined_call_operand.hbm [shape: f32[8,128], index: 0, kind: input, shape index: {}]
  %s1 = inlined_call_operand.hbm [shape: f32[8,128], index: 1, kind: output, shape index: {}]
  %s2 = sld [smem:[#allocation0]]
  $region41: #{tpu_custom_call.1} parent=0
    _
  %s4 = ssub.s32 1, %s2
  %s5 = scalar_select 0, %s4, %s2
  $region1: #{tpu_custom_call.1} parent=0
    #allocation2 [shape = 'u8[4096]{0}', space=vmem, size = 0x1000, scoped, tag = 'input window, operand 0, single buffered']
    #allocation3 [shape = 's32[2]{0}', space=sflag, size = 0x8, scoped, tag = 'scoped memory for tpu_custom_call.1']
    #allocation4 [shape = 's32[2]{0}', space=sflag, size = 0x8, scoped, tag = 'scoped memory for tpu_custom_call.1']
    #allocation5 [shape = 'u8[4096]{0}', space=vmem, size = 0x1000, scoped, tag = 'output window, operand 0, single buffered']
    %6 = vsyncpa [#allocation3], 0
    %7 = vsyncpa [#allocation4], 0
    loop: start=0, step=1, limit=4
    $region2: #{tpu_custom_call.1} parent=1 // loop_pre_header
      _
    $region3: #{tpu_custom_call.1} parent=1 // loop_header
      %s9 = sphi 0, %s13
      %p10 = scmp.ge.s32.totalorder %s9, 4
      %s17 = sphi 0, %s17
      %s19 = sphi 0, %s17
      %s20 = sphi 0, %s19
      %s34 = sphi 0, %s20
      %s38 = sphi 0, %s38
      %s40 = sphi 0, %s38
      %s41 = sphi 0, %s40
      %s55 = sphi 0, %s41
    $region4: #{tpu_custom_call.1} parent=1 // loop_header_branch
      %12 = sbr.rel (%p10) target = $region8
    $region5: #{tpu_custom_call.1} parent=1 // loop_body
      %s14 = ssub.s32 %s9, 1
      %s15 = ssub.s32 %s9, 2
      %s16 = sadd.s32 %s9, 1
      %s18 = sadd.s32 %s17, 1
      %p21 = scmp.eq.s32.totalorder %s9, 1
      %p22 = scmp.ne.s32.totalorder %s17, %s19
      %p23 = scmp.eq.s32.totalorder %s9, 0
      %p24 = por %p22, %p23
      %p25 = scmp.ne.s32.totalorder %s17, %s19
      %p26 = scmp.eq.s32.totalorder %s14, 1
      %p27 = por %p25, %p26
      %p28 = scmp.ne.s32.totalorder %s19, %s20
      %p29 = scmp.eq.s32.totalorder %s14, 0
      %p30 = por %p28, %p29
      %p31 = scmp.ne.s32.totalorder %s19, %s20
      %p32 = scmp.eq.s32.totalorder %s15, 1
      %p33 = por %p31, %p32
      %p35 = scmp.ne.s32.totalorder %s20, %s34
      %p36 = scmp.eq.s32.totalorder %s15, 0
      %p37 = por %p35, %p36
      %s39 = sadd.s32 %s38, 1
      %p42 = scmp.eq.s32.totalorder %s9, 1
      %p43 = scmp.ne.s32.totalorder %s38, %s40
      %p44 = scmp.eq.s32.totalorder %s9, 0
      %p45 = por %p43, %p44
      %p46 = scmp.ne.s32.totalorder %s38, %s40
      %p47 = scmp.eq.s32.totalorder %s14, 1
      %p48 = por %p46, %p47
      %p49 = scmp.ne.s32.totalorder %s40, %s41
      %p50 = scmp.eq.s32.totalorder %s14, 0
      %p51 = por %p49, %p50
      %p52 = scmp.ne.s32.totalorder %s40, %s41
      %p53 = scmp.eq.s32.totalorder %s15, 1
      %p54 = por %p52, %p53
      %p56 = scmp.ne.s32.totalorder %s41, %s55
      %p57 = scmp.eq.s32.totalorder %s15, 0
      %p58 = por %p56, %p57
      %p59 = scmp.le.s32.totalorder 1, %s9
      %p60 = scmp.lt.s32.totalorder %s9, 3
      %p61 = pnand %p59, %p60
      %p62 = pneg %p61
      // Predicated region
      $region9: #{tpu_custom_call.1} parent=5 // pred_check
        _
      $region10: #{tpu_custom_call.1} parent=5 // pred_check_branch
        %64 = sbr.rel (%p61) target = $region12
      $region11: #{tpu_custom_call.1} parent=5 // pred_region
        %s65 = ssub.s32 %s9, 1
        // Predicated region
        $region13: #{tpu_custom_call.1} parent=11 // pred_check
          %p66 = pneg %p30
        $region14: #{tpu_custom_call.1} parent=11 // pred_check_branch
          %68 = sbr.rel (%p66) target = $region16
        $region15: #{tpu_custom_call.1} parent=11 // pred_region
          %s70 = ssub.s32 128, 128
          %71 = vsyncadd [#allocation3], %s70
          %s73 = sshll.u32 [#allocation2], 4
          %s74 = int_to_ptr.vmem [resolvable:$true] %s73
          %76 = dma.hbm_to_vmem [thread:$0]  %s0, 128, %s74, [#allocation3]
        $region16: #{tpu_custom_call.1} parent=11 // pred_fallthru
          _
      $region12: #{tpu_custom_call.1} parent=5 // pred_fallthru
        _
      %p77 = scmp.lt.s32.totalorder %s9, 2
      // Predicated region
      $region17: #{tpu_custom_call.1} parent=5 // pred_check
        %p78 = pneg %p77
      $region18: #{tpu_custom_call.1} parent=5 // pred_check_branch
        %80 = sbr.rel (%p78) target = $region20
      $region19: #{tpu_custom_call.1} parent=5 // pred_region
        _
      $region20: #{tpu_custom_call.1} parent=5 // pred_fallthru
        _
      %p81 = scmp.le.s32.totalorder 1, %s9
      %p82 = scmp.lt.s32.totalorder %s9, 3
      %p83 = pnand %p81, %p82
      %p84 = pneg %p83
      // Predicated region
      $region21: #{tpu_custom_call.1} parent=5 // pred_check
        _
      $region22: #{tpu_custom_call.1} parent=5 // pred_check_branch
        %86 = sbr.rel (%p83) target = $region24
      $region23: #{tpu_custom_call.1} parent=5 // pred_region
        %s87 = ssub.s32 %s9, 1
        // Predicated region
        $region25: #{tpu_custom_call.1} parent=23 // pred_check
          %p88 = pneg %p30
        $region26: #{tpu_custom_call.1} parent=23 // pred_check_branch
          %90 = sbr.rel (%p88) target = $region28
        $region27: #{tpu_custom_call.1} parent=23 // pred_region
          %91 = dma.done [#allocation3], 128
        $region28: #{tpu_custom_call.1} parent=23 // pred_fallthru
          _
        %p92 = pneg %p30
        %p93 = pneg %p27
        %p94 = pneg %p51
        %p95 = pneg %p48
        %v96 = vld [vmem:[#allocation2] sm:$0xff]
        %v97 = vadd.f32 %v96, 1.0
        %98 = vst [vmem:[#allocation5] sm:$0xff] %v97
        // Predicated region
        $region29: #{tpu_custom_call.1} parent=23 // pred_check
          %p99 = pneg %p48
        $region30: #{tpu_custom_call.1} parent=23 // pred_check_branch
          %101 = sbr.rel (%p99) target = $region32
        $region31: #{tpu_custom_call.1} parent=23 // pred_region
          %s103 = ssub.s32 128, 128
          %104 = vsyncadd [#allocation4], %s103
          %s106 = sshll.u32 [#allocation5], 4
          %s107 = int_to_ptr.vmem [resolvable:$true] %s106
          %109 = dma.vmem_to_hbm [thread:$0]  %s107, 128, %s1, [#allocation4]
        $region32: #{tpu_custom_call.1} parent=23 // pred_fallthru
          _
        // Predicated region
        $region33: #{tpu_custom_call.1} parent=23 // pred_check
          %p110 = pneg %p48
        $region34: #{tpu_custom_call.1} parent=23 // pred_check_branch
          %112 = sbr.rel (%p110) target = $region36
        $region35: #{tpu_custom_call.1} parent=23 // pred_region
          %113 = dma.done [#allocation4], 128
        $region36: #{tpu_custom_call.1} parent=23 // pred_fallthru
          _
      $region24: #{tpu_custom_call.1} parent=5 // pred_fallthru
        _
      %p114 = scmp.le.s32.totalorder 2, %s9
      // Predicated region
      $region37: #{tpu_custom_call.1} parent=5 // pred_check
        %p115 = pneg %p114
      $region38: #{tpu_custom_call.1} parent=5 // pred_check_branch
        %117 = sbr.rel (%p115) target = $region40
      $region39: #{tpu_custom_call.1} parent=5 // pred_region
        %s118 = ssub.s32 %s9, 2
      $region40: #{tpu_custom_call.1} parent=5 // pred_fallthru
        _
    $region6: #{tpu_custom_call.1} parent=1 // loop_footer
      %s13 = sadd.s32 1, %s9
    $region7: #{tpu_custom_call.1} parent=1 // loop_footer_branch
      %8 = sbr.rel target = $region3
    $region8: #{tpu_custom_call.1} parent=1 // loop_exit
      _
    %119 = vsyncpa [#allocation3], 1
    %s120 = scalar_lea.sflag [#allocation3], 1
    %121 = vsyncpa %s120, 1
    %122 = vsyncpa [#allocation4], 1
    %s123 = scalar_lea.sflag [#allocation4], 1
    %124 = vsyncpa %s123, 1

// kernel: bottleneck_forward.1
$region0: #{bottleneck_forward.1}
  #allocation0 [shape = 'u32[]', space=smem, size = 0x4, offset = 0x4, fixed_abs, tag = 'smem constant byte address 0x4 - core index']
  #allocation1 [shape = 'u32[144,128]{1,0:T(1,128)}', space=vmem, size = 0x12000, scoped, tag = 'internal scratch']
  #allocation2 [shape = 'f32[2,6,16,128]{3,2,1,0:T(8,128)}', space=vmem, size = 0x18000, scoped, tag = 'scratch operand']
  #allocation3 [shape = 'f32[6,16,384]{2,1,0:T(8,128)}', space=vmem, size = 0x24000, scoped, tag = 'scratch operand']
  #allocation4 [shape = 's32[2]{0}', space=sflag, size = 0x8, scoped, tag = 'scratch operand']
  #allocation5 [shape = 's32[]', space=sflag, size = 0x4, offset = 0, fixed_abs, tag = 'sflag constant byte address 0x0 - dummy sync flag']
  #allocation6 [shape = 's32[]', space=sflag, size = 0x4, offset = 0, fixed_abs, tag = 'sflag constant byte address 0x0 - dummy sync flag']
  %s0 = inlined_call_operand.vmem [shape: f32[2,18,16,128], index: 0, kind: input, shape index: {}]
  %s1 = inlined_call_operand.vmem [shape: f32[128,128], index: 1, kind: input, shape index: {}]
  %s2 = inlined_call_operand.vmem [shape: f32[1,128], index: 2, kind: input, shape index: {}]
  %s3 = inlined_call_operand.vmem [shape: f32[3,384,128], index: 3, kind: input, shape index: {}]
  %s4 = inlined_call_operand.vmem [shape: f32[1,128], index: 4, kind: input, shape index: {}]
  %s5 = inlined_call_operand.vmem [shape: f32[128,128], index: 5, kind: input, shape index: {}]
  %s6 = inlined_call_operand.vmem [shape: f32[1,128], index: 6, kind: input, shape index: {}]
  %s7 = inlined_call_operand.vmem [shape: f32[2,16,16,128], index: 7, kind: output, shape index: {}]
  %s8 = sld [smem:[#allocation0]]
  $region145: #{bottleneck_forward.1} parent=0
    _
  %s10 = ssub.s32 1, %s8
  %s11 = scalar_select 0, %s10, %s8
  loop: start=0, step=1, limit=10
  $region2: #{bottleneck_forward.1} parent=0 // loop_pre_header
    _
  $region3: #{bottleneck_forward.1} parent=0 // loop_header
    %s13 = sphi 0, %s17
    %p14 = scmp.ge.s32.totalorder %s13, 10
    %s20 = sphi 0, %s32
    %s21 = sphi 0, %s28
    %s22 = sphi 0, %s20
    %s23 = sphi 0, %s21
    %s24 = sphi 0, %s22
    %s25 = sphi 0, %s23
    %s33 = sphi 0, %s33
    %s35 = sphi 0, %s33
    %s36 = sphi 0, %s35
    %s50 = sphi 0, %s36
    %s54 = sphi 0, %s54
    %s56 = sphi 0, %s54
    %s57 = sphi 0, %s56
    %s71 = sphi 0, %s57
    %s75 = sphi 0, %s75
    %s77 = sphi 0, %s75
    %s78 = sphi 0, %s77
    %s92 = sphi 0, %s78
    %s96 = sphi 0, %s96
    %s98 = sphi 0, %s96
    %s99 = sphi 0, %s98
    %s113 = sphi 0, %s99
    %s117 = sphi 0, %s117
    %s119 = sphi 0, %s117
    %s120 = sphi 0, %s119
    %s134 = sphi 0, %s120
    %s138 = sphi 0, %s138
    %s140 = sphi 0, %s138
    %s141 = sphi 0, %s140
    %s155 = sphi 0, %s141
    %s163 = sphi 0, %s165
    %s166 = sphi 0, %s163
    %s167 = sphi 0, %s166
    %s183 = sphi 0, %s167
  $region4: #{bottleneck_forward.1} parent=0 // loop_header_branch
    %16 = sbr.rel (%p14) target = $region8
  $region5: #{bottleneck_forward.1} parent=0 // loop_body
    %s18 = ssub.s32 %s13, 1
    %s19 = ssub.s32 %s13, 2
    %s26 = sadd.s32 1, %s21
    %p27 = scmp.ge.s32.totalorder %s26, 4
    %s28 = scalar_select %p27, 0, %s26
    %s29 = sadd.s32 1, %s20
    %s30 = scalar_select %p27, %s29, %s20
    %p31 = scmp.ge.s32.totalorder %s30, 2
    %s32 = scalar_select %p31, 0, %s30
    %s34 = sadd.s32 %s33, 1
    %p37 = scmp.eq.s32.totalorder %s13, 7
    %p38 = scmp.ne.s32.totalorder %s33, %s35
    %p39 = scmp.eq.s32.totalorder %s13, 0
    %p40 = por %p38, %p39
    %p41 = scmp.ne.s32.totalorder %s33, %s35
    %p42 = scmp.eq.s32.totalorder %s18, 7
    %p43 = por %p41, %p42
    %p44 = scmp.ne.s32.totalorder %s35, %s36
    %p45 = scmp.eq.s32.totalorder %s18, 0
    %p46 = por %p44, %p45
    %p47 = scmp.ne.s32.totalorder %s35, %s36
    %p48 = scmp.eq.s32.totalorder %s19, 7
    %p49 = por %p47, %p48
    %p51 = scmp.ne.s32.totalorder %s36, %s50
    %p52 = scmp.eq.s32.totalorder %s19, 0
    %p53 = por %p51, %p52
    %s55 = sadd.s32 %s54, 1
    %p58 = scmp.eq.s32.totalorder %s13, 7
    %p59 = scmp.ne.s32.totalorder %s54, %s56
    %p60 = scmp.eq.s32.totalorder %s13, 0
    %p61 = por %p59, %p60
    %p62 = scmp.ne.s32.totalorder %s54, %s56
    %p63 = scmp.eq.s32.totalorder %s18, 7
    %p64 = por %p62, %p63
    %p65 = scmp.ne.s32.totalorder %s56, %s57
    %p66 = scmp.eq.s32.totalorder %s18, 0
    %p67 = por %p65, %p66
    %p68 = scmp.ne.s32.totalorder %s56, %s57
    %p69 = scmp.eq.s32.totalorder %s19, 7
    %p70 = por %p68, %p69
    %p72 = scmp.ne.s32.totalorder %s57, %s71
    %p73 = scmp.eq.s32.totalorder %s19, 0
    %p74 = por %p72, %p73
    %s76 = sadd.s32 %s75, 1
    %p79 = scmp.eq.s32.totalorder %s13, 7
    %p80 = scmp.ne.s32.totalorder %s75, %s77
    %p81 = scmp.eq.s32.totalorder %s13, 0
    %p82 = por %p80, %p81
    %p83 = scmp.ne.s32.totalorder %s75, %s77
    %p84 = scmp.eq.s32.totalorder %s18, 7
    %p85 = por %p83, %p84
    %p86 = scmp.ne.s32.totalorder %s77, %s78
    %p87 = scmp.eq.s32.totalorder %s18, 0
    %p88 = por %p86, %p87
    %p89 = scmp.ne.s32.totalorder %s77, %s78
    %p90 = scmp.eq.s32.totalorder %s19, 7
    %p91 = por %p89, %p90
    %p93 = scmp.ne.s32.totalorder %s78, %s92
    %p94 = scmp.eq.s32.totalorder %s19, 0
    %p95 = por %p93, %p94
    %s97 = sadd.s32 %s96, 1
    %p100 = scmp.eq.s32.totalorder %s13, 7
    %p101 = scmp.ne.s32.totalorder %s96, %s98
    %p102 = scmp.eq.s32.totalorder %s13, 0
    %p103 = por %p101, %p102
    %p104 = scmp.ne.s32.totalorder %s96, %s98
    %p105 = scmp.eq.s32.totalorder %s18, 7
    %p106 = por %p104, %p105
    %p107 = scmp.ne.s32.totalorder %s98, %s99
    %p108 = scmp.eq.s32.totalorder %s18, 0
    %p109 = por %p107, %p108
    %p110 = scmp.ne.s32.totalorder %s98, %s99
    %p111 = scmp.eq.s32.totalorder %s19, 7
    %p112 = por %p110, %p111
    %p114 = scmp.ne.s32.totalorder %s99, %s113
    %p115 = scmp.eq.s32.totalorder %s19, 0
    %p116 = por %p114, %p115
    %s118 = sadd.s32 %s117, 1
    %p121 = scmp.eq.s32.totalorder %s13, 7
    %p122 = scmp.ne.s32.totalorder %s117, %s119
    %p123 = scmp.eq.s32.totalorder %s13, 0
    %p124 = por %p122, %p123
    %p125 = scmp.ne.s32.totalorder %s117, %s119
    %p126 = scmp.eq.s32.totalorder %s18, 7
    %p127 = por %p125, %p126
    %p128 = scmp.ne.s32.totalorder %s119, %s120
    %p129 = scmp.eq.s32.totalorder %s18, 0
    %p130 = por %p128, %p129
    %p131 = scmp.ne.s32.totalorder %s119, %s120
    %p132 = scmp.eq.s32.totalorder %s19, 7
    %p133 = por %p131, %p132
    %p135 = scmp.ne.s32.totalorder %s120, %s134
    %p136 = scmp.eq.s32.totalorder %s19, 0
    %p137 = por %p135, %p136
    %s139 = sadd.s32 %s138, 1
    %p142 = scmp.eq.s32.totalorder %s13, 7
    %p143 = scmp.ne.s32.totalorder %s138, %s140
    %p144 = scmp.eq.s32.totalorder %s13, 0
    %p145 = por %p143, %p144
    %p146 = scmp.ne.s32.totalorder %s138, %s140
    %p147 = scmp.eq.s32.totalorder %s18, 7
    %p148 = por %p146, %p147
    %p149 = scmp.ne.s32.totalorder %s140, %s141
    %p150 = scmp.eq.s32.totalorder %s18, 0
    %p151 = por %p149, %p150
    %p152 = scmp.ne.s32.totalorder %s140, %s141
    %p153 = scmp.eq.s32.totalorder %s19, 7
    %p154 = por %p152, %p153
    %p156 = scmp.ne.s32.totalorder %s141, %s155
    %p157 = scmp.eq.s32.totalorder %s19, 0
    %p158 = por %p156, %p157
    %s159 = ssub.s32 %s20, %s32
    %s160 = ssub.s32 %s21, %s28
    %s161 = sor.u32 %s159, %s160
    %p162 = scmp.eq.s32.totalorder %s161, 0
    %s164 = sadd.s32 %s163, 1
    %s165 = scalar_select %p162, %s163, %s164
    %p168 = pneg %p162
    %p169 = scmp.eq.s32.totalorder %s13, 7
    %p170 = por %p168, %p169
    %p171 = scmp.ne.s32.totalorder %s163, %s166
    %p172 = scmp.eq.s32.totalorder %s13, 0
    %p173 = por %p171, %p172
    %p174 = scmp.ne.s32.totalorder %s163, %s166
    %p175 = scmp.eq.s32.totalorder %s18, 7
    %p176 = por %p174, %p175
    %p177 = scmp.ne.s32.totalorder %s166, %s167
    %p178 = scmp.eq.s32.totalorder %s18, 0
    %p179 = por %p177, %p178
    %p180 = scmp.ne.s32.totalorder %s166, %s167
    %p181 = scmp.eq.s32.totalorder %s19, 7
    %p182 = por %p180, %p181
    %p184 = scmp.ne.s32.totalorder %s167, %s183
    %p185 = scmp.eq.s32.totalorder %s19, 0
    %p186 = por %p184, %p185
    %p187 = scmp.le.s32.totalorder 1, %s13
    %p188 = scmp.lt.s32.totalorder %s13, 9
    %p189 = pnand %p187, %p188
    %p190 = pneg %p189
    // Predicated region
    $region9: #{bottleneck_forward.1} parent=5 // pred_check
      _
    $region10: #{bottleneck_forward.1} parent=5 // pred_check_branch
      %192 = sbr.rel (%p189) target = $region12
    $region11: #{bottleneck_forward.1} parent=5 // pred_region
      %s193 = ssub.s32 %s13, 1
      // Predicated region
      $region13: #{bottleneck_forward.1} parent=11 // pred_check
        %p194 = pneg %p46
      $region14: #{bottleneck_forward.1} parent=11 // pred_check_branch
        %196 = sbr.rel (%p194) target = $region16
      $region15: #{bottleneck_forward.1} parent=11 // pred_region
        _
      $region16: #{bottleneck_forward.1} parent=11 // pred_fallthru
        _
      // Predicated region
      $region17: #{bottleneck_forward.1} parent=11 // pred_check
        %p197 = pneg %p67
      $region18: #{bottleneck_forward.1} parent=11 // pred_check_branch
        %199 = sbr.rel (%p197) target = $region20
      $region19: #{bottleneck_forward.1} parent=11 // pred_region
        _
      $region20: #{bottleneck_forward.1} parent=11 // pred_fallthru
        _
      // Predicated region
      $region21: #{bottleneck_forward.1} parent=11 // pred_check
        %p200 = pneg %p88
      $region22: #{bottleneck_forward.1} parent=11 // pred_check_branch
        %202 = sbr.rel (%p200) target = $region24
      $region23: #{bottleneck_forward.1} parent=11 // pred_region
        _
      $region24: #{bottleneck_forward.1} parent=11 // pred_fallthru
        _
      // Predicated region
      $region25: #{bottleneck_forward.1} parent=11 // pred_check
        %p203 = pneg %p109
      $region26: #{bottleneck_forward.1} parent=11 // pred_check_branch
        %205 = sbr.rel (%p203) target = $region28
      $region27: #{bottleneck_forward.1} parent=11 // pred_region
        _
      $region28: #{bottleneck_forward.1} parent=11 // pred_fallthru
        _
      // Predicated region
      $region29: #{bottleneck_forward.1} parent=11 // pred_check
        %p206 = pneg %p130
      $region30: #{bottleneck_forward.1} parent=11 // pred_check_branch
        %208 = sbr.rel (%p206) target = $region32
      $region31: #{bottleneck_forward.1} parent=11 // pred_region
        _
      $region32: #{bottleneck_forward.1} parent=11 // pred_fallthru
        _
      // Predicated region
      $region33: #{bottleneck_forward.1} parent=11 // pred_check
        %p209 = pneg %p151
      $region34: #{bottleneck_forward.1} parent=11 // pred_check_branch
        %211 = sbr.rel (%p209) target = $region36
      $region35: #{bottleneck_forward.1} parent=11 // pred_region
        _
      $region36: #{bottleneck_forward.1} parent=11 // pred_fallthru
        _
    $region12: #{bottleneck_forward.1} parent=5 // pred_fallthru
      _
    %p212 = scmp.lt.s32.totalorder %s13, 8
    // Predicated region
    $region37: #{bottleneck_forward.1} parent=5 // pred_check
      %p213 = pneg %p212
    $region38: #{bottleneck_forward.1} parent=5 // pred_check_branch
      %215 = sbr.rel (%p213) target = $region40
    $region39: #{bottleneck_forward.1} parent=5 // pred_region
      _
    $region40: #{bottleneck_forward.1} parent=5 // pred_fallthru
      _
    %p216 = scmp.le.s32.totalorder 1, %s13
    %p217 = scmp.lt.s32.totalorder %s13, 9
    %p218 = pnand %p216, %p217
    %p219 = pneg %p218
    // Predicated region
    $region41: #{bottleneck_forward.1} parent=5 // pred_check
      _
    $region42: #{bottleneck_forward.1} parent=5 // pred_check_branch
      %221 = sbr.rel (%p218) target = $region44
    $region43: #{bottleneck_forward.1} parent=5 // pred_region
      %s222 = ssub.s32 %s13, 1
      %p223 = pneg %p46
      %p224 = pneg %p43
      %p225 = pneg %p67
      %p226 = pneg %p64
      %p227 = pneg %p88
      %p228 = pneg %p85
      %p229 = pneg %p109
      %p230 = pneg %p106
      %p231 = pneg %p130
      %p232 = pneg %p127
      %p233 = pneg %p151
      %p234 = pneg %p148
      %p235 = pneg %p179
      %p236 = pneg %p176
      %s237 = smul.u32 4, %s23
      %p238 = scmp.lt.s32.totalorder %s22, 1
      %s239 = scalar_select %p238, %s22, 1
      %p240 = scmp.lt.s32.totalorder %s237, 15
      %s241 = scalar_select %p240, %s237, 15
      %s242 = smul.addr %s241, 2
      %s243 = smul.addr %s239, 32
      %s244 = sadd.s32 %s242, %s243
      %s245 = smul.addr %s244, 8
      %s246 = scalar_lea.vmem %s7, %s245
      %s247 = smul.u32 4, %s23
      %p248 = scmp.lt.s32.totalorder %s22, 1
      %s249 = scalar_select %p248, %s22, 1
      %p250 = scmp.lt.s32.totalorder %s247, 15
      %s251 = scalar_select %p250, %s247, 15
      %s252 = smul.addr %s251, 2
      %s253 = smul.addr %s249, 32
      %s254 = sadd.s32 %s252, %s253
      %s255 = smul.addr %s254, 8
      %s256 = scalar_lea.vmem %s7, %s255
      %s257 = smul.u32 4, %s23
      %p258 = scmp.lt.s32.totalorder %s23, 0
      %s259 = ssub.s32 0, %s23
      %s260 = scalar_select %p258, %s259, %s23
      %s261 = sand.u32 %s260, 1
      %s262 = ssub.s32 0, %s261
      %s263 = scalar_select %p258, %s262, %s261
      %p264 = scmp.ne.s32.totalorder %s263, 0
      %p265 = scmp.lt.s32.totalorder %s263, 0
      %p266 = pnand %p265, %p264
      %p267 = pneg %p266
      %s268 = sadd.s32 %s263, 2
      %s269 = scalar_select %p267, %s268, %s263
      %p270 = scmp.eq.s32.totalorder %s23, 0
      // Predicated region
      $region45: #{bottleneck_forward.1} parent=43 // pred_check
        %p271 = pneg %p270
      $region46: #{bottleneck_forward.1} parent=43 // pred_check_branch
        %273 = sbr.rel (%p271) target = $region48
      $region47: #{bottleneck_forward.1} parent=43 // pred_region
        %s274 = smul.u32 %s22, 288
        %s275 = scalar_lea.vmem %s0, %s274
        %s276 = smul.u32 %s269, 96
        %s277 = scalar_lea.vmem [#allocation2], %s276
        %s278 = scalar_lea.sflag [#allocation4], %s269
        %p280 = scmp.lt.u32.totalorder 96, 8
        %p281 = pneg %p280
        // Predicated region
        $region49: #{bottleneck_forward.1} parent=47 // pred_check
          _
        $region50: #{bottleneck_forward.1} parent=47 // pred_check_branch
          %283 = sbr.rel (%p280) target = $region52
        $region51: #{bottleneck_forward.1} parent=47 // pred_region
          %s298 = sand.u32 96, 7
          %p299 = scmp.eq.s32.totalorder %s298, 0
          // Predicated region
          $region64: #{bottleneck_forward.1} parent=51 // pred_check
            %p300 = pneg %p299
          $region65: #{bottleneck_forward.1} parent=51 // pred_check_branch
            %302 = sbr.rel (%p300) target = $region67
          $region66: #{bottleneck_forward.1} parent=51 // pred_region
            loop: start=0, step=1, limit=1
            $region68: #{bottleneck_forward.1} parent=66 // loop_pre_header
              _
            $region69: #{bottleneck_forward.1} parent=66 // loop_header
              %s304 = sphi 0, %s308
              %p305 = scmp.ge.s32.totalorder %s304, 1
              %s309 = sphi %s275, %s275
              %s310 = sphi %s277, %s277
            $region70: #{bottleneck_forward.1} parent=66 // loop_header_branch
              %307 = sbr.rel (%p305) target = $region74
            $region71: #{bottleneck_forward.1} parent=66 // loop_body
              %v311 = vld [vmem:[%s309] sm:$0xff]
              %312 = vst [vmem:[%s310] sm:$0xff] %v311
              %v313 = vld [vmem:[%s309 + $0x8] sm:$0xff]
              %314 = vst [vmem:[%s310 + $0x8] sm:$0xff] %v313
              %v315 = vld [vmem:[%s309 + $0x10] sm:$0xff]
              %316 = vst [vmem:[%s310 + $0x10] sm:$0xff] %v315
              %v317 = vld [vmem:[%s309 + $0x18] sm:$0xff]
              %318 = vst [vmem:[%s310 + $0x18] sm:$0xff] %v317
              %v319 = vld [vmem:[%s309 + $0x20] sm:$0xff]
              %320 = vst [vmem:[%s310 + $0x20] sm:$0xff] %v319
              %v321 = vld [vmem:[%s309 + $0x28] sm:$0xff]
              %322 = vst [vmem:[%s310 + $0x28] sm:$0xff] %v321
              %v323 = vld [vmem:[%s309 + $0x30] sm:$0xff]
              %324 = vst [vmem:[%s310 + $0x30] sm:$0xff] %v323
              %v325 = vld [vmem:[%s309 + $0x38] sm:$0xff]
              %326 = vst [vmem:[%s310 + $0x38] sm:$0xff] %v325
              %v327 = vld [vmem:[%s309 + $0x40] sm:$0xff]
              %328 = vst [vmem:[%s310 + $0x40] sm:$0xff] %v327
              %v329 = vld [vmem:[%s309 + $0x48] sm:$0xff]
              %330 = vst [vmem:[%s310 + $0x48] sm:$0xff] %v329
              %v331 = vld [vmem:[%s309 + $0x50] sm:$0xff]
              %332 = vst [vmem:[%s310 + $0x50] sm:$0xff] %v331
              %v333 = vld [vmem:[%s309 + $0x58] sm:$0xff]
              %334 = vst [vmem:[%s310 + $0x58] sm:$0xff] %v333
            $region72: #{bottleneck_forward.1} parent=66 // loop_footer
              %s308 = sadd.s32 1, %s304
            $region73: #{bottleneck_forward.1} parent=66 // loop_footer_branch
              %303 = sbr.rel target = $region69
            $region74: #{bottleneck_forward.1} parent=66 // loop_exit
              _
          $region67: #{bottleneck_forward.1} parent=51 // pred_fallthru
            _
          %p335 = pneg %p299
          // Predicated region
          $region75: #{bottleneck_forward.1} parent=51 // pred_check
            _
          $region76: #{bottleneck_forward.1} parent=51 // pred_check_branch
            %337 = sbr.rel (%p299) target = $region78
          $region77: #{bottleneck_forward.1} parent=51 // pred_region
            %s338 = sand.u32 96, 7
          $region78: #{bottleneck_forward.1} parent=51 // pred_fallthru
            _
        $region52: #{bottleneck_forward.1} parent=47 // pred_fallthru
          _
        // Predicated region
        $region53: #{bottleneck_forward.1} parent=47 // pred_check
          %p284 = pneg %p280
        $region54: #{bottleneck_forward.1} parent=47 // pred_check_branch
          %286 = sbr.rel (%p284) target = $region56
        $region55: #{bottleneck_forward.1} parent=47 // pred_region
          %s287 = sshllo.u32 0, 96
          loop: start=0, step=1, limit=1
          $region57: #{bottleneck_forward.1} parent=55 // loop_pre_header
            _
          $region58: #{bottleneck_forward.1} parent=55 // loop_header
            %s289 = sphi 0, %s293
            %p290 = scmp.ge.s32.totalorder %s289, 1
            %s294 = sphi %s275, %s275
            %s295 = sphi %s277, %s277
          $region59: #{bottleneck_forward.1} parent=55 // loop_header_branch
            %292 = sbr.rel (%p290) target = $region63
          $region60: #{bottleneck_forward.1} parent=55 // loop_body
            %v296 = vld [vmem:[%s294] sm:%s287]
            %297 = vst [vmem:[%s295] sm:%s287] %v296
          $region61: #{bottleneck_forward.1} parent=55 // loop_footer
            %s293 = sadd.s32 1, %s289
          $region62: #{bottleneck_forward.1} parent=55 // loop_footer_branch
            %288 = sbr.rel target = $region58
          $region63: #{bottleneck_forward.1} parent=55 // loop_exit
            _
        $region56: #{bottleneck_forward.1} parent=47 // pred_fallthru
          _
        // Predicated region
        $region79: #{bottleneck_forward.1} parent=47 // pred_check
          _
        $region80: #{bottleneck_forward.1} parent=47 // pred_check_branch
          %341 = sbr.rel (0) target = $region82
        $region81: #{bottleneck_forward.1} parent=47 // pred_region
          %342 = vsyncadd %s278, 1536
        $region82: #{bottleneck_forward.1} parent=47 // pred_fallthru
          _
      $region48: #{bottleneck_forward.1} parent=43 // pred_fallthru
        _
      %s343 = sadd.s32 %s23, 1
      %p344 = scmp.lt.s32.totalorder %s343, 4
      // Predicated region
      $region83: #{bottleneck_forward.1} parent=43 // pred_check
        %p345 = pneg %p344
      $region84: #{bottleneck_forward.1} parent=43 // pred_check_branch
        %347 = sbr.rel (%p345) target = $region86
      $region85: #{bottleneck_forward.1} parent=43 // pred_region
        %s348 = ssub.s32 1, %s269
        %s349 = smul.u32 %s343, 4
        %s350 = smul.u32 %s349, 16
        %s351 = smul.u32 %s22, 288
        %s352 = sadd.s32 %s350, %s351
        %s353 = scalar_lea.vmem %s0, %s352
        %s354 = smul.u32 %s348, 96
        %s355 = scalar_lea.vmem [#allocation2], %s354
        %s356 = scalar_lea.sflag [#allocation4], %s348
        %p358 = scmp.lt.u32.totalorder 96, 8
        %p359 = pneg %p358
        // Predicated region
        $region87: #{bottleneck_forward.1} parent=85 // pred_check
          _
        $region88: #{bottleneck_forward.1} parent=85 // pred_check_branch
          %361 = sbr.rel (%p358) target = $region90
        $region89: #{bottleneck_forward.1} parent=85 // pred_region
          %s376 = sand.u32 96, 7
          %p377 = scmp.eq.s32.totalorder %s376, 0
          // Predicated region
          $region102: #{bottleneck_forward.1} parent=89 // pred_check
            %p378 = pneg %p377
          $region103: #{bottleneck_forward.1} parent=89 // pred_check_branch
            %380 = sbr.rel (%p378) target = $region105
          $region104: #{bottleneck_forward.1} parent=89 // pred_region
            loop: start=0, step=1, limit=1
            $region106: #{bottleneck_forward.1} parent=104 // loop_pre_header
              _
            $region107: #{bottleneck_forward.1} parent=104 // loop_header
              %s382 = sphi 0, %s386
              %p383 = scmp.ge.s32.totalorder %s382, 1
              %s387 = sphi %s353, %s353
              %s388 = sphi %s355, %s355
            $region108: #{bottleneck_forward.1} parent=104 // loop_header_branch
              %385 = sbr.rel (%p383) target = $region112
            $region109: #{bottleneck_forward.1} parent=104 // loop_body
              %v389 = vld [vmem:[%s387] sm:$0xff]
              %390 = vst [vmem:[%s388] sm:$0xff] %v389
              %v391 = vld [vmem:[%s387 + $0x8] sm:$0xff]
              %392 = vst [vmem:[%s388 + $0x8] sm:$0xff] %v391
              %v393 = vld [vmem:[%s387 + $0x10] sm:$0xff]
              %394 = vst [vmem:[%s388 + $0x10] sm:$0xff] %v393
              %v395 = vld [vmem:[%s387 + $0x18] sm:$0xff]
              %396 = vst [vmem:[%s388 + $0x18] sm:$0xff] %v395
              %v397 = vld [vmem:[%s387 + $0x20] sm:$0xff]
              %398 = vst [vmem:[%s388 + $0x20] sm:$0xff] %v397
              %v399 = vld [vmem:[%s387 + $0x28] sm:$0xff]
              %400 = vst [vmem:[%s388 + $0x28] sm:$0xff] %v399
              %v401 = vld [vmem:[%s387 + $0x30] sm:$0xff]
              %402 = vst [vmem:[%s388 + $0x30] sm:$0xff] %v401
              %v403 = vld [vmem:[%s387 + $0x38] sm:$0xff]
              %404 = vst [vmem:[%s388 + $0x38] sm:$0xff] %v403
              %v405 = vld [vmem:[%s387 + $0x40] sm:$0xff]
              %406 = vst [vmem:[%s388 + $0x40] sm:$0xff] %v405
              %v407 = vld [vmem:[%s387 + $0x48] sm:$0xff]
              %408 = vst [vmem:[%s388 + $0x48] sm:$0xff] %v407
              %v409 = vld [vmem:[%s387 + $0x50] sm:$0xff]
              %410 = vst [vmem:[%s388 + $0x50] sm:$0xff] %v409
              %v411 = vld [vmem:[%s387 + $0x58] sm:$0xff]
              %412 = vst [vmem:[%s388 + $0x58] sm:$0xff] %v411
            $region110: #{bottleneck_forward.1} parent=104 // loop_footer
              %s386 = sadd.s32 1, %s382
            $region111: #{bottleneck_forward.1} parent=104 // loop_footer_branch
              %381 = sbr.rel target = $region107
            $region112: #{bottleneck_forward.1} parent=104 // loop_exit
              _
          $region105: #{bottleneck_forward.1} parent=89 // pred_fallthru
            _
          %p413 = pneg %p377
          // Predicated region
          $region113: #{bottleneck_forward.1} parent=89 // pred_check
            _
          $region114: #{bottleneck_forward.1} parent=89 // pred_check_branch
            %415 = sbr.rel (%p377) target = $region116
          $region115: #{bottleneck_forward.1} parent=89 // pred_region
            %s416 = sand.u32 96, 7
          $region116: #{bottleneck_forward.1} parent=89 // pred_fallthru
            _
        $region90: #{bottleneck_forward.1} parent=85 // pred_fallthru
          _
        // Predicated region
        $region91: #{bottleneck_forward.1} parent=85 // pred_check
          %p362 = pneg %p358
        $region92: #{bottleneck_forward.1} parent=85 // pred_check_branch
          %364 = sbr.rel (%p362) target = $region94
        $region93: #{bottleneck_forward.1} parent=85 // pred_region
          %s365 = sshllo.u32 0, 96
          loop: start=0, step=1, limit=1
          $region95: #{bottleneck_forward.1} parent=93 // loop_pre_header
            _
          $region96: #{bottleneck_forward.1} parent=93 // loop_header
            %s367 = sphi 0, %s371
            %p368 = scmp.ge.s32.totalorder %s367, 1
            %s372 = sphi %s353, %s353
            %s373 = sphi %s355, %s355
          $region97: #{bottleneck_forward.1} parent=93 // loop_header_branch
            %370 = sbr.rel (%p368) target = $region101
          $region98: #{bottleneck_forward.1} parent=93 // loop_body
            %v374 = vld [vmem:[%s372] sm:%s365]
            %375 = vst [vmem:[%s373] sm:%s365] %v374
          $region99: #{bottleneck_forward.1} parent=93 // loop_footer
            %s371 = sadd.s32 1, %s367
          $region100: #{bottleneck_forward.1} parent=93 // loop_footer_branch
            %366 = sbr.rel target = $region96
          $region101: #{bottleneck_forward.1} parent=93 // loop_exit
            _
        $region94: #{bottleneck_forward.1} parent=85 // pred_fallthru
          _
        // Predicated region
        $region117: #{bottleneck_forward.1} parent=85 // pred_check
          _
        $region118: #{bottleneck_forward.1} parent=85 // pred_check_branch
          %419 = sbr.rel (0) target = $region120
        $region119: #{bottleneck_forward.1} parent=85 // pred_region
          %420 = vsyncadd %s356, 1536
        $region120: #{bottleneck_forward.1} parent=85 // pred_fallthru
          _
      $region86: #{bottleneck_forward.1} parent=43 // pred_fallthru
        _
      %s421 = smul.u32 %s269, 96
      %s422 = scalar_lea.vmem [#allocation2], %s421
      %s423 = scalar_lea.sflag [#allocation4], %s269
      %s424 = smul.u32 6, 16
      %s425 = smul.u32 %s424, 1
      %s426 = sshll.u32 %s425, 4
      %427 = dma.done %s423, %s426
      %v428 = vld [vmem:[%s422] sm:$0xff]
      %v429 = vld [vmem:[%s422 + $0x8] sm:$0xff]
      %v430 = vld [vmem:[%s422 + $0x10] sm:$0xff]
      %v431 = vld [vmem:[%s422 + $0x18] sm:$0xff]
      %v432 = vld [vmem:[%s422 + $0x20] sm:$0xff]
      %v433 = vld [vmem:[%s422 + $0x28] sm:$0xff]
      %v434 = vld [vmem:[%s422 + $0x30] sm:$0xff]
      %v435 = vld [vmem:[%s422 + $0x38] sm:$0xff]
      %v436 = vld [vmem:[%s422 + $0x40] sm:$0xff]
      %v437 = vld [vmem:[%s422 + $0x48] sm:$0xff]
      %v438 = vld [vmem:[%s422 + $0x50] sm:$0xff]
      %v439 = vld [vmem:[%s422 + $0x58] sm:$0xff]
      %v440 = vld [vmem:[%s1] sm:$0xff]
      %v441 = vld [vmem:[%s1 + $0x8] sm:$0xff]
      %v442 = vld [vmem:[%s1 + $0x10] sm:$0xff]
      %v443 = vld [vmem:[%s1 + $0x18] sm:$0xff]
      %v444 = vld [vmem:[%s1 + $0x20] sm:$0xff]
      %v445 = vld [vmem:[%s1 + $0x28] sm:$0xff]
      %v446 = vld [vmem:[%s1 + $0x30] sm:$0xff]
      %v447 = vld [vmem:[%s1 + $0x38] sm:$0xff]
      %v448 = vld [vmem:[%s1 + $0x40] sm:$0xff]
      %v449 = vld [vmem:[%s1 + $0x48] sm:$0xff]
      %v450 = vld [vmem:[%s1 + $0x50] sm:$0xff]
      %v451 = vld [vmem:[%s1 + $0x58] sm:$0xff]
      %v452 = vld [vmem:[%s1 + $0x60] sm:$0xff]
      %v453 = vld [vmem:[%s1 + $0x68] sm:$0xff]
      %v454 = vld [vmem:[%s1 + $0x70] sm:$0xff]
      %v455 = vld [vmem:[%s1 + $0x78] sm:$0xff]
      %v456 = vld [vmem:[%s2] sm:$0x1]
      %v458 = vlaneseq
      %v459 = vshrl.u32 %v458, 7
      %v460 = vsub.s32 0, %v459
      %v461 = vrot.slane %v456, %v460
      %463 = vmatprep.subr.mxu0 0.0
      %464 = vmatpush1.msra.mxu0 %v440
      %465 = vmatprep.subr.mxu0 0.0
      %466 = vmatpush1.msra.mxu0 %v441
      %467 = vmatprep.subr.mxu0 0.0
      %468 = vmatpush1.msra.mxu0 %v442
      %469 = vmatprep.subr.mxu0 0.0
      %470 = vmatpush1.msra.mxu0 %v443
      %471 = vmatprep.subr.mxu0 0.0
      %472 = vmatpush1.msra.mxu0 %v444
      %473 = vmatprep.subr.mxu0 0.0
      %474 = vmatpush1.msra.mxu0 %v445
      %475 = vmatprep.subr.mxu0 0.0
      %476 = vmatpush1.msra.mxu0 %v446
      %477 = vmatprep.subr.mxu0 0.0
      %478 = vmatpush1.msra.mxu0 %v447
      %479 = vmatprep.subr.mxu0 0.0
      %480 = vmatpush1.msra.mxu0 %v448
      %481 = vmatprep.subr.mxu0 0.0
      %482 = vmatpush1.msra.mxu0 %v449
      %483 = vmatprep.subr.mxu0 0.0
      %484 = vmatpush1.msra.mxu0 %v450
      %485 = vmatprep.subr.mxu0 0.0
      %486 = vmatpush1.msra.mxu0 %v451
      %487 = vmatprep.subr.mxu0 0.0
      %488 = vmatpush1.msra.mxu0 %v452
      %489 = vmatprep.subr.mxu0 0.0
      %490 = vmatpush1.msra.mxu0 %v453
      %491 = vmatprep.subr.mxu0 0.0
      %492 = vmatpush1.msra.mxu0 %v454
      %493 = vmatprep.subr.mxu0 0.0
      %494 = vmatpush1.msra.mxu0 %v455
      %495 = vmatprep.subr.mxu0 0.0
      %496 = vmatpush1.msra.mxu0 0.0
      %497 = vmatprep.subr.mxu0 0.0
      %498 = vmatpush1.msra.mxu0 0.0
      %499 = vmatprep.subr.mxu0 0.0
      %500 = vmatpush1.msra.mxu0 0.0
      %501 = vmatprep.subr.mxu0 0.0
      %502 = vmatpush1.msra.mxu0 0.0
      %503 = vmatprep.subr.mxu0 0.0
      %504 = vmatpush1.msra.mxu0 0.0
      %505 = vmatprep.subr.mxu0 0.0
      %506 = vmatpush1.msra.mxu0 0.0
      %507 = vmatprep.subr.mxu0 0.0
      %508 = vmatpush1.msra.mxu0 0.0
      %509 = vmatprep.subr.mxu0 0.0
      %510 = vmatpush1.msra.mxu0 0.0
      %511 = vmatprep.subr.mxu0 0.0
      %512 = vmatpush1.msra.mxu0 0.0
      %513 = vmatprep.subr.mxu0 0.0
      %514 = vmatpush1.msra.mxu0 0.0
      %515 = vmatprep.subr.mxu0 0.0
      %516 = vmatpush1.msra.mxu0 0.0
      %517 = vmatprep.subr.mxu0 0.0
      %518 = vmatpush1.msra.mxu0 0.0
      %519 = vmatprep.subr.mxu0 0.0
      %520 = vmatpush1.msra.mxu0 0.0
      %521 = vmatprep.subr.mxu0 0.0
      %522 = vmatpush1.msra.mxu0 0.0
      %523 = vmatprep.subr.mxu0 0.0
      %524 = vmatpush1.msra.mxu0 0.0
      %525 = vmatprep.subr.mxu0 0.0
      %526 = vmatpush1.msra.mxu0 0.0
      %527 = vmatprep.mubr.f32.mxu0 0.0
      %528 = vmatmul.mubr.f32.gmra.mrb[0].mxu0 %v428
      %v529 = vpop.f32.mrb[0].mxu0
      %v530 = vadd.f32 %v461, %v529
      %v531 = vpop.f32.mrb[0].mxu0
      %532 = vmatprep.mubr.f32.mxu0 0.0
      %533 = vmatmul.mubr.f32.gmra.mrb[0].mxu0 %v429
      %v534 = vpop.f32.mrb[0].mxu0
      %v535 = vadd.f32 %v461, %v534
      %v536 = vpop.f32.mrb[0].mxu0
      %537 = vmatprep.mubr.f32.mxu0 0.0
      %538 = vmatmul.mubr.f32.gmra.mrb[0].mxu0 %v430
      %v539 = vpop.f32.mrb[0].mxu0
      %v540 = vadd.f32 %v461, %v539
      %v541 = vpop.f32.mrb[0].mxu0
      %542 = vmatprep.mubr.f32.mxu0 0.0
      %543 = vmatmul.mubr.f32.gmra.mrb[0].mxu0 %v431
      %v544 = vpop.f32.mrb[0].mxu0
      %v545 = vadd.f32 %v461, %v544
      %v546 = vpop.f32.mrb[0].mxu0
      %547 = vmatprep.mubr.f32.mxu0 0.0
      %548 = vmatmul.mubr.f32.gmra.mrb[0].mxu0 %v432
      %v549 = vpop.f32.mrb[0].mxu0
      %v550 = vadd.f32 %v461, %v549
      %v551 = vpop.f32.mrb[0].mxu0
      %552 = vmatprep.mubr.f32.mxu0 0.0
      %553 = vmatmul.mubr.f32.gmra.mrb[0].mxu0 %v433
      %v554 = vpop.f32.mrb[0].mxu0
      %v555 = vadd.f32 %v461, %v554
      %v556 = vpop.f32.mrb[0].mxu0
      %557 = vmatprep.mubr.f32.mxu0 0.0
      %558 = vmatmul.mubr.f32.gmra.mrb[0].mxu0 %v434
      %v559 = vpop.f32.mrb[0].mxu0
      %v560 = vadd.f32 %v461, %v559
      %v561 = vpop.f32.mrb[0].mxu0
      %562 = vmatprep.mubr.f32.mxu0 0.0
      %563 = vmatmul.mubr.f32.gmra.mrb[0].mxu0 %v435
      %v564 = vpop.f32.mrb[0].mxu0
      %v565 = vadd.f32 %v461, %v564
      %v566 = vpop.f32.mrb[0].mxu0
      %567 = vmatprep.mubr.f32.mxu0 0.0
      %568 = vmatmul.mubr.f32.gmra.mrb[0].mxu0 %v436
      %v569 = vpop.f32.mrb[0].mxu0
      %v570 = vadd.f32 %v461, %v569
      %v571 = vpop.f32.mrb[0].mxu0
      %572 = vmatprep.mubr.f32.mxu0 0.0
      %573 = vmatmul.mubr.f32.gmra.mrb[0].mxu0 %v437
      %v574 = vpop.f32.mrb[0].mxu0
      %v575 = vadd.f32 %v461, %v574
      %v576 = vpop.f32.mrb[0].mxu0
      %577 = vmatprep.mubr.f32.mxu0 0.0
      %578 = vmatmul.mubr.f32.gmra.mrb[0].mxu0 %v438
      %v579 = vpop.f32.mrb[0].mxu0
      %v580 = vadd.f32 %v461, %v579
      %v581 = vpop.f32.mrb[0].mxu0
      %582 = vmatprep.mubr.f32.mxu0 0.0
      %583 = vmatmul.mubr.f32.gmra.mrb[0].mxu0 %v439
      %v584 = vpop.f32.mrb[0].mxu0
      %v585 = vadd.f32 %v461, %v584
      %v586 = vpop.f32.mrb[0].mxu0
      %587 = vdwg.mxu0
      %v588 = vmax.f32 %v530, 0.0
      %v589 = vmax.f32 %v535, 0.0
      %v590 = vmax.f32 %v540, 0.0
      %v591 = vmax.f32 %v545, 0.0
      %v592 = vmax.f32 %v550, 0.0
      %v593 = vmax.f32 %v555, 0.0
      %v594 = vmax.f32 %v560, 0.0
      %v595 = vmax.f32 %v565, 0.0
      %v596 = vmax.f32 %v570, 0.0
      %v597 = vmax.f32 %v575, 0.0
      %v598 = vmax.f32 %v580, 0.0
      %v599 = vmax.f32 %v585, 0.0
      // Predicated region
      $region121: #{bottleneck_forward.1} parent=43 // pred_check
        %p600 = pneg %p270
      $region122: #{bottleneck_forward.1} parent=43 // pred_check_branch
        %602 = sbr.rel (%p600) target = $region124
      $region123: #{bottleneck_forward.1} parent=43 // pred_region
        %603 = vst [vmem:[#allocation3] sm:$0x1] 0.0
        %604 = vst [vmem:[#allocation3 + $0x30] sm:$0x1] 0.0
        %605 = vst [vmem:[#allocation3 + $0x60] sm:$0x1] 0.0
        %606 = vst [vmem:[#allocation3 + $0x90] sm:$0x1] 0.0
        %607 = vst [vmem:[#allocation3 + $0xc0] sm:$0x1] 0.0
        %608 = vst [vmem:[#allocation3 + $0xf0] sm:$0x1] 0.0
        %609 = vst [vmem:[#allocation3 + $0x2f] sm:$0x1] 0.0
        %610 = vst [vmem:[#allocation3 + $0x5f] sm:$0x1] 0.0
        %611 = vst [vmem:[#allocation3 + $0x8f] sm:$0x1] 0.0
        %612 = vst [vmem:[#allocation3 + $0xbf] sm:$0x1] 0.0
        %613 = vst [vmem:[#allocation3 + $0xef] sm:$0x1] 0.0
        %614 = vst [vmem:[#allocation3 + $0x11f] sm:$0x1] 0.0
      $region124: #{bottleneck_forward.1} parent=43 // pred_fallthru
        _
      %vm627 = vcmask 1040384
      %v628 = vrot.slane %v588, 7
      %v629 = vrot.slane %v589, 7
      %v630 = vsel %vm627, %v628, %v629
      %v631 = vrot.slane %v590, 7
      %v632 = vrot.slane %v591, 7
      %v633 = vsel %vm627, %v631, %v632
      %v634 = vrot.slane %v592, 7
      %v635 = vrot.slane %v593, 7
      %v636 = vsel %vm627, %v634, %v635
      %v637 = vrot.slane %v594, 7
      %v638 = vrot.slane %v595, 7
      %v639 = vsel %vm627, %v637, %v638
      %v640 = vrot.slane %v596, 7
      %v641 = vrot.slane %v597, 7
      %v642 = vsel %vm627, %v640, %v641
      %v643 = vrot.slane %v598, 7
      %v644 = vrot.slane %v599, 7
      %v645 = vsel %vm627, %v643, %v644
      %658 = vst [vmem:[#allocation3] sm:$0xfe] %v628
      %659 = vst [vmem:[#allocation3 + $0x18] sm:$0xff] %v630
      %660 = vst [vmem:[#allocation3 + $0x30] sm:$0xfe] %v631
      %661 = vst [vmem:[#allocation3 + $0x48] sm:$0xff] %v633
      %662 = vst [vmem:[#allocation3 + $0x60] sm:$0xfe] %v634
      %663 = vst [vmem:[#allocation3 + $0x78] sm:$0xff] %v636
      %664 = vst [vmem:[#allocation3 + $0x90] sm:$0xfe] %v637
      %665 = vst [vmem:[#allocation3 + $0xa8] sm:$0xff] %v639
      %666 = vst [vmem:[#allocation3 + $0xc0] sm:$0xfe] %v640
      %667 = vst [vmem:[#allocation3 + $0xd8] sm:$0xff] %v642
      %668 = vst [vmem:[#allocation3 + $0xf0] sm:$0xfe] %v643
      %669 = vst [vmem:[#allocation3 + $0x108] sm:$0xff] %v645
      %670 = vst [vmem:[#allocation3 + $0x8] sm:$0xff] %v588
      %671 = vst [vmem:[#allocation3 + $0x20] sm:$0xff] %v589
      %672 = vst [vmem:[#allocation3 + $0x38] sm:$0xff] %v590
      %673 = vst [vmem:[#allocation3 + $0x50] sm:$0xff] %v591
      %674 = vst [vmem:[#allocation3 + $0x68] sm:$0xff] %v592
      %675 = vst [vmem:[#allocation3 + $0x80] sm:$0xff] %v593
      %676 = vst [vmem:[#allocation3 + $0x98] sm:$0xff] %v594
      %677 = vst [vmem:[#allocation3 + $0xb0] sm:$0xff] %v595
      %678 = vst [vmem:[#allocation3 + $0xc8] sm:$0xff] %v596
      %679 = vst [vmem:[#allocation3 + $0xe0] sm:$0xff] %v597
      %680 = vst [vmem:[#allocation3 + $0xf8] sm:$0xff] %v598
      %681 = vst [vmem:[#allocation3 + $0x110] sm:$0xff] %v599
      %vm682 = vcmask 1046528
      %v683 = vrot.slane %v588, 1
      %v684 = vrot.slane %v589, 1
      %v685 = vsel %vm682, %v683, %v684
      %v686 = vrot.slane %v590, 1
      %v687 = vrot.slane %v591, 1
      %v688 = vsel %vm682, %v686, %v687
      %v689 = vrot.slane %v592, 1
      %v690 = vrot.slane %v593, 1
      %v691 = vsel %vm682, %v689, %v690
      %v692 = vrot.slane %v594, 1
      %v693 = vrot.slane %v595, 1
      %v694 = vsel %vm682, %v692, %v693
      %v695 = vrot.slane %v596, 1
      %v696 = vrot.slane %v597, 1
      %v697 = vsel %vm682, %v695, %v696
      %v698 = vrot.slane %v598, 1
      %v699 = vrot.slane %v599, 1
      %v700 = vsel %vm682, %v698, %v699
      %713 = vst [vmem:[#allocation3 + $0x10] sm:$0xff] %v685
      %714 = vst [vmem:[#allocation3 + $0x28] sm:$0x7f] %v684
      %715 = vst [vmem:[#allocation3 + $0x40] sm:$0xff] %v688
      %716 = vst [vmem:[#allocation3 + $0x58] sm:$0x7f] %v687
      %717 = vst [vmem:[#allocation3 + $0x70] sm:$0xff] %v691
      %718 = vst [vmem:[#allocation3 + $0x88] sm:$0x7f] %v690
      %719 = vst [vmem:[#allocation3 + $0xa0] sm:$0xff] %v694
      %720 = vst [vmem:[#allocation3 + $0xb8] sm:$0x7f] %v693
      %721 = vst [vmem:[#allocation3 + $0xd0] sm:$0xff] %v697
      %722 = vst [vmem:[#allocation3 + $0xe8] sm:$0x7f] %v696
      %723 = vst [vmem:[#allocation3 + $0x100] sm:$0xff] %v700
      %724 = vst [vmem:[#allocation3 + $0x118] sm:$0x7f] %v699
      // Predicated region
      $region125: #{bottleneck_forward.1} parent=43 // pred_check
        %p725 = pneg %p270
      $region126: #{bottleneck_forward.1} parent=43 // pred_check_branch
        %727 = sbr.rel (%p725) target = $region128
      $region127: #{bottleneck_forward.1} parent=43 // pred_region
        %728 = vst [vmem:[#allocation3] sm:$0xff] 0.0
        %729 = vst [vmem:[#allocation3 + $0x8] sm:$0xff] 0.0
        %730 = vst [vmem:[#allocation3 + $0x10] sm:$0xff] 0.0
        %731 = vst [vmem:[#allocation3 + $0x18] sm:$0xff] 0.0
        %732 = vst [vmem:[#allocation3 + $0x20] sm:$0xff] 0.0
        %733 = vst [vmem:[#allocation3 + $0x28] sm:$0xff] 0.0
      $region128: #{bottleneck_forward.1} parent=43 // pred_fallthru
        _
      %p734 = scmp.eq.s32.totalorder %s23, 3
      // Predicated region
      $region129: #{bottleneck_forward.1} parent=43 // pred_check
        %p735 = pneg %p734
      $region130: #{bottleneck_forward.1} parent=43 // pred_check_branch
        %737 = sbr.rel (%p735) target = $region132
      $region131: #{bottleneck_forward.1} parent=43 // pred_region
        %s738 = scalar_lea.vmem [#allocation3], 240
        %739 = vst [vmem:[%s738] sm:$0xff] 0.0
        %740 = vst [vmem:[%s738 + $0x8] sm:$0xff] 0.0
        %741 = vst [vmem:[%s738 + $0x10] sm:$0xff] 0.0
        %742 = vst [vmem:[%s738 + $0x18] sm:$0xff] 0.0
        %743 = vst [vmem:[%s738 + $0x20] sm:$0xff] 0.0
        %744 = vst [vmem:[%s738 + $0x28] sm:$0xff] 0.0
      $region132: #{bottleneck_forward.1} parent=43 // pred_fallthru
        _
      %v745 = vld [vmem:[#allocation3] sm:$0xff]
      %v746 = vld [vmem:[#allocation3 + $0x8] sm:$0xff]
      %v747 = vld [vmem:[#allocation3 + $0x10] sm:$0xff]
      %v748 = vld [vmem:[#allocation3 + $0x18] sm:$0xff]
      %v749 = vld [vmem:[#allocation3 + $0x20] sm:$0xff]
      %v750 = vld [vmem:[#allocation3 + $0x28] sm:$0xff]
      %v751 = vld [vmem:[#allocation3 + $0x30] sm:$0xff]
      %v752 = vld [vmem:[#allocation3 + $0x38] sm:$0xff]
      %v753 = vld [vmem:[#allocation3 + $0x40] sm:$0xff]
      %v754 = vld [vmem:[#allocation3 + $0x48] sm:$0xff]
      %v755 = vld [vmem:[#allocation3 + $0x50] sm:$0xff]
      %v756 = vld [vmem:[#allocation3 + $0x58] sm:$0xff]
      %v757 = vld [vmem:[#allocation3 + $0x60] sm:$0xff]
      %v758 = vld [vmem:[#allocation3 + $0x68] sm:$0xff]
      %v759 = vld [vmem:[#allocation3 + $0x70] sm:$0xff]
      %v760 = vld [vmem:[#allocation3 + $0x78] sm:$0xff]
      %v761 = vld [vmem:[#allocation3 + $0x80] sm:$0xff]
      %v762 = vld [vmem:[#allocation3 + $0x88] sm:$0xff]
      %v763 = vld [vmem:[#allocation3 + $0x90] sm:$0xff]
      %v764 = vld [vmem:[#allocation3 + $0x98] sm:$0xff]
      %v765 = vld [vmem:[#allocation3 + $0xa0] sm:$0xff]
      %v766 = vld [vmem:[#allocation3 + $0xa8] sm:$0xff]
      %v767 = vld [vmem:[#allocation3 + $0xb0] sm:$0xff]
      %v768 = vld [vmem:[#allocation3 + $0xb8] sm:$0xff]
      %v769 = vld [vmem:[%s3] sm:$0xff]
      %v770 = vld [vmem:[%s3 + $0x8] sm:$0xff]
      %v771 = vld [vmem:[%s3 + $0x10] sm:$0xff]
      %v772 = vld [vmem:[%s3 + $0x18] sm:$0xff]
      %v773 = vld [vmem:[%s3 + $0x20] sm:$0xff]
      %v774 = vld [vmem:[%s3 + $0x28] sm:$0xff]
      %v775 = vld [vmem:[%s3 + $0x30] sm:$0xff]
      %v776 = vld [vmem:[%s3 + $0x38] sm:$0xff]
      %v777 = vld [vmem:[%s3 + $0x40] sm:$0xff]
      %v778 = vld [vmem:[%s3 + $0x48] sm:$0xff]
      %v779 = vld [vmem:[%s3 + $0x50] sm:$0xff]
      %v780 = vld [vmem:[%s3 + $0x58] sm:$0xff]
      %v781 = vld [vmem:[%s3 + $0x60] sm:$0xff]
      %v782 = vld [vmem:[%s3 + $0x68] sm:$0xff]
      %v783 = vld [vmem:[%s3 + $0x70] sm:$0xff]
      %v784 = vld [vmem:[%s3 + $0x78] sm:$0xff]
      %v785 = vld [vmem:[%s3 + $0x80] sm:$0xff]
      %v786 = vld [vmem:[%s3 + $0x88] sm:$0xff]
      %v787 = vld [vmem:[%s3 + $0x90] sm:$0xff]
      %v788 = vld [vmem:[%s3 + $0x98] sm:$0xff]
      %v789 = vld [vmem:[%s3 + $0xa0] sm:$0xff]
      %v790 = vld [vmem:[%s3 + $0xa8] sm:$0xff]
      %v791 = vld [vmem:[%s3 + $0xb0] sm:$0xff]
      %v792 = vld [vmem:[%s3 + $0xb8] sm:$0xff]
      %v793 = vld [vmem:[%s3 + $0xc0] sm:$0xff]
      %v794 = vld [vmem:[%s3 + $0xc8] sm:$0xff]
      %v795 = vld [vmem:[%s3 + $0xd0] sm:$0xff]
      %v796 = vld [vmem:[%s3 + $0xd8] sm:$0xff]
      %v797 = vld [vmem:[%s3 + $0xe0] sm:$0xff]
      %v798 = vld [vmem:[%s3 + $0xe8] sm:$0xff]
      %v799 = vld [vmem:[%s3 + $0xf0] sm:$0xff]
      %v800 = vld [vmem:[%s3 + $0xf8] sm:$0xff]
      %v801 = vld [vmem:[%s3 + $0x100] sm:$0xff]
      %v802 = vld [vmem:[%s3 + $0x108] sm:$0xff]
      %v803 = vld [vmem:[%s3 + $0x110] sm:$0xff]
      %v804 = vld [vmem:[%s3 + $0x118] sm:$0xff]
      %v805 = vld [vmem:[%s3 + $0x120] sm:$0xff]
      %v806 = vld [vmem:[%s3 + $0x128] sm:$0xff]
      %v807 = vld [vmem:[%s3 + $0x130] sm:$0xff]
      %v808 = vld [vmem:[%s3 + $0x138] sm:$0xff]
      %v809 = vld [vmem:[%s3 + $0x140] sm:$0xff]
      %v810 = vld [vmem:[%s3 + $0x148] sm:$0xff]
      %v811 = vld [vmem:[%s3 + $0x150] sm:$0xff]
      %v812 = vld [vmem:[%s3 + $0x158] sm:$0xff]
      %v813 = vld [vmem:[%s3 + $0x160] sm:$0xff]
      %v814 = vld [vmem:[%s3 + $0x168] sm:$0xff]
      %v815 = vld [vmem:[%s3 + $0x170] sm:$0xff]
      %v816 = vld [vmem:[%s3 + $0x178] sm:$0xff]
      %s817 = scalar_lea.vmem [#allocation3], 48
      %v818 = vld [vmem:[%s817] sm:$0xff]
      %v819 = vld [vmem:[%s817 + $0x8] sm:$0xff]
      %v820 = vld [vmem:[%s817 + $0x10] sm:$0xff]
      %v821 = vld [vmem:[%s817 + $0x18] sm:$0xff]
      %v822 = vld [vmem:[%s817 + $0x20] sm:$0xff]
      %v823 = vld [vmem:[%s817 + $0x28] sm:$0xff]
      %v824 = vld [vmem:[%s817 + $0x30] sm:$0xff]
      %v825 = vld [vmem:[%s817 + $0x38] sm:$0xff]
      %v826 = vld [vmem:[%s817 + $0x40] sm:$0xff]
      %v827 = vld [vmem:[%s817 + $0x48] sm:$0xff]
      %v828 = vld [vmem:[%s817 + $0x50] sm:$0xff]
      %v829 = vld [vmem:[%s817 + $0x58] sm:$0xff]
      %v830 = vld [vmem:[%s817 + $0x60] sm:$0xff]
      %v831 = vld [vmem:[%s817 + $0x68] sm:$0xff]
      %v832 = vld [vmem:[%s817 + $0x70] sm:$0xff]
      %v833 = vld [vmem:[%s817 + $0x78] sm:$0xff]
      %v834 = vld [vmem:[%s817 + $0x80] sm:$0xff]
      %v835 = vld [vmem:[%s817 + $0x88] sm:$0xff]
      %v836 = vld [vmem:[%s817 + $0x90] sm:$0xff]
      %v837 = vld [vmem:[%s817 + $0x98] sm:$0xff]
      %v838 = vld [vmem:[%s817 + $0xa0] sm:$0xff]
      %v839 = vld [vmem:[%s817 + $0xa8] sm:$0xff]
      %v840 = vld [vmem:[%s817 + $0xb0] sm:$0xff]
      %v841 = vld [vmem:[%s817 + $0xb8] sm:$0xff]
      %s842 = scalar_lea.vmem %s3, 384
      %v843 = vld [vmem:[%s842] sm:$0xff]
      %v844 = vld [vmem:[%s842 + $0x8] sm:$0xff]
      %v845 = vld [vmem:[%s842 + $0x10] sm:$0xff]
      %v846 = vld [vmem:[%s842 + $0x18] sm:$0xff]
      %v847 = vld [vmem:[%s842 + $0x20] sm:$0xff]
      %v848 = vld [vmem:[%s842 + $0x28] sm:$0xff]
      %v849 = vld [vmem:[%s842 + $0x30] sm:$0xff]
      %v850 = vld [vmem:[%s842 + $0x38] sm:$0xff]
      %v851 = vld [vmem:[%s842 + $0x40] sm:$0xff]
      %v852 = vld [vmem:[%s842 + $0x48] sm:$0xff]
      %v853 = vld [vmem:[%s842 + $0x50] sm:$0xff]
      %v854 = vld [vmem:[%s842 + $0x58] sm:$0xff]
      %v855 = vld [vmem:[%s842 + $0x60] sm:$0xff]
      %v856 = vld [vmem:[%s842 + $0x68] sm:$0xff]
      %v857 = vld [vmem:[%s842 + $0x70] sm:$0xff]
      %v858 = vld [vmem:[%s842 + $0x78] sm:$0xff]
      %v859 = vld [vmem:[%s842 + $0x80] sm:$0xff]
      %v860 = vld [vmem:[%s842 + $0x88] sm:$0xff]
      %v861 = vld [vmem:[%s842 + $0x90] sm:$0xff]
      %v862 = vld [vmem:[%s842 + $0x98] sm:$0xff]
      %v863 = vld [vmem:[%s842 + $0xa0] sm:$0xff]
      %v864 = vld [vmem:[%s842 + $0xa8] sm:$0xff]
      %v865 = vld [vmem:[%s842 + $0xb0] sm:$0xff]
      %v866 = vld [vmem:[%s842 + $0xb8] sm:$0xff]
      %v867 = vld [vmem:[%s842 + $0xc0] sm:$0xff]
      %v868 = vld [vmem:[%s842 + $0xc8] sm:$0xff]
      %v869 = vld [vmem:[%s842 + $0xd0] sm:$0xff]
      %v870 = vld [vmem:[%s842 + $0xd8] sm:$0xff]
      %v871 = vld [vmem:[%s842 + $0xe0] sm:$0xff]
      %v872 = vld [vmem:[%s842 + $0xe8] sm:$0xff]
      %v873 = vld [vmem:[%s842 + $0xf0] sm:$0xff]
      %v874 = vld [vmem:[%s842 + $0xf8] sm:$0xff]
      %v875 = vld [vmem:[%s842 + $0x100] sm:$0xff]
      %v876 = vld [vmem:[%s842 + $0x108] sm:$0xff]
      %v877 = vld [vmem:[%s842 + $0x110] sm:$0xff]
      %v878 = vld [vmem:[%s842 + $0x118] sm:$0xff]
      %v879 = vld [vmem:[%s842 + $0x120] sm:$0xff]
      %v880 = vld [vmem:[%s842 + $0x128] sm:$0xff]
      %v881 = vld [vmem:[%s842 + $0x130] sm:$0xff]
      %v882 = vld [vmem:[%s842 + $0x138] sm:$0xff]
      %v883 = vld [vmem:[%s842 + $0x140] sm:$0xff]
      %v884 = vld [vmem:[%s842 + $0x148] sm:$0xff]
      %v885 = vld [vmem:[%s842 + $0x150] sm:$0xff]
      %v886 = vld [vmem:[%s842 + $0x158] sm:$0xff]
      %v887 = vld [vmem:[%s842 + $0x160] sm:$0xff]
      %v888 = vld [vmem:[%s842 + $0x168] sm:$0xff]
      %v889 = vld [vmem:[%s842 + $0x170] sm:$0xff]
      %v890 = vld [vmem:[%s842 + $0x178] sm:$0xff]
      %891 = vmatprep.subr.mxu0 0.0
      %892 = vmatpush1.msra.mxu0 %v843
      %893 = vmatprep.subr.mxu0 0.0
      %894 = vmatpush1.msra.mxu0 %v844
      %895 = vmatprep.subr.mxu0 0.0
      %896 = vmatpush1.msra.mxu0 %v845
      %897 = vmatprep.subr.mxu0 0.0
      %898 = vmatpush1.msra.mxu0 %v846
      %899 = vmatprep.subr.mxu0 0.0
      %900 = vmatpush1.msra.mxu0 %v847
      %901 = vmatprep.subr.mxu0 0.0
      %902 = vmatpush1.msra.mxu0 %v848
      %903 = vmatprep.subr.mxu0 0.0
      %904 = vmatpush1.msra.mxu0 %v849
      %905 = vmatprep.subr.mxu0 0.0
      %906 = vmatpush1.msra.mxu0 %v850
      %907 = vmatprep.subr.mxu0 0.0
      %908 = vmatpush1.msra.mxu0 %v851
      %909 = vmatprep.subr.mxu0 0.0
      %910 = vmatpush1.msra.mxu0 %v852
      %911 = vmatprep.subr.mxu0 0.0
      %912 = vmatpush1.msra.mxu0 %v853
      %913 = vmatprep.subr.mxu0 0.0
      %914 = vmatpush1.msra.mxu0 %v854
      %915 = vmatprep.subr.mxu0 0.0
      %916 = vmatpush1.msra.mxu0 %v855
      %917 = vmatprep.subr.mxu0 0.0
      %918 = vmatpush1.msra.mxu0 %v856
      %919 = vmatprep.subr.mxu0 0.0
      %920 = vmatpush1.msra.mxu0 %v857
      %921 = vmatprep.subr.mxu0 0.0
      %922 = vmatpush1.msra.mxu0 %v858
      %923 = vmatprep.subr.mxu0 0.0
      %924 = vmatpush1.msra.mxu0 %v859
      %925 = vmatprep.subr.mxu0 0.0
      %926 = vmatpush1.msra.mxu0 %v860
      %927 = vmatprep.subr.mxu0 0.0
      %928 = vmatpush1.msra.mxu0 %v861
      %929 = vmatprep.subr.mxu0 0.0
      %930 = vmatpush1.msra.mxu0 %v862
      %931 = vmatprep.subr.mxu0 0.0
      %932 = vmatpush1.msra.mxu0 %v863
      %933 = vmatprep.subr.mxu0 0.0
      %934 = vmatpush1.msra.mxu0 %v864
      %935 = vmatprep.subr.mxu0 0.0
      %936 = vmatpush1.msra.mxu0 %v865
      %937 = vmatprep.subr.mxu0 0.0
      %938 = vmatpush1.msra.mxu0 %v866
      %939 = vmatprep.subr.mxu0 0.0
      %940 = vmatpush1.msra.mxu0 %v867
      %941 = vmatprep.subr.mxu0 0.0
      %942 = vmatpush1.msra.mxu0 %v868
      %943 = vmatprep.subr.mxu0 0.0
      %944 = vmatpush1.msra.mxu0 %v869
      %945 = vmatprep.subr.mxu0 0.0
      %946 = vmatpush1.msra.mxu0 %v870
      %947 = vmatprep.subr.mxu0 0.0
      %948 = vmatpush1.msra.mxu0 %v871
      %949 = vmatprep.subr.mxu0 0.0
      %950 = vmatpush1.msra.mxu0 %v872
      %951 = vmatprep.subr.mxu0 0.0
      %952 = vmatpush1.msra.mxu0 %v873
      %953 = vmatprep.subr.mxu0 0.0
      %954 = vmatpush1.msra.mxu0 %v874
      %955 = vmatprep.mubr.f32.mxu0 %v819
      %956 = vmatmul.mubr.f32.gmra.mrb[0].mxu0 %v818
      %v957 = vpop.f32.mrb[0].mxu0
      %v958 = vadd.f32 0.0, %v957
      %v959 = vpop.f32.mrb[0].mxu0
      %960 = vmatprep.mubr.f32.mxu0 %v822
      %961 = vmatmul.mubr.f32.gmra.mrb[0].mxu0 %v821
      %v962 = vpop.f32.mrb[0].mxu0
      %v963 = vadd.f32 0.0, %v962
      %v964 = vpop.f32.mrb[0].mxu0
      %965 = vmatprep.mubr.f32.mxu0 %v825
      %966 = vmatmul.mubr.f32.gmra.mrb[0].mxu0 %v824
      %v967 = vpop.f32.mrb[0].mxu0
      %v968 = vadd.f32 0.0, %v967
      %v969 = vpop.f32.mrb[0].mxu0
      %970 = vmatprep.mubr.f32.mxu0 %v828
      %971 = vmatmul.mubr.f32.gmra.mrb[0].mxu0 %v827
      %v972 = vpop.f32.mrb[0].mxu0
      %v973 = vadd.f32 0.0, %v972
      %v974 = vpop.f32.mrb[0].mxu0
      %975 = vmatprep.mubr.f32.mxu0 %v831
      %976 = vmatmul.mubr.f32.gmra.mrb[0].mxu0 %v830
      %v977 = vpop.f32.mrb[0].mxu0
      %v978 = vadd.f32 0.0, %v977
      %v979 = vpop.f32.mrb[0].mxu0
      %980 = vmatprep.mubr.f32.mxu0 %v834
      %981 = vmatmul.mubr.f32.gmra.mrb[0].mxu0 %v833
      %v982 = vpop.f32.mrb[0].mxu0
      %v983 = vadd.f32 0.0, %v982
      %v984 = vpop.f32.mrb[0].mxu0
      %985 = vmatprep.mubr.f32.mxu0 %v837
      %986 = vmatmul.mubr.f32.gmra.mrb[0].mxu0 %v836
      %v987 = vpop.f32.mrb[0].mxu0
      %v988 = vadd.f32 0.0, %v987
      %v989 = vpop.f32.mrb[0].mxu0
      %990 = vmatprep.mubr.f32.mxu0 %v840
      %991 = vmatmul.mubr.f32.gmra.mrb[0].mxu0 %v839
      %v992 = vpop.f32.mrb[0].mxu0
      %v993 = vadd.f32 0.0, %v992
      %v994 = vpop.f32.mrb[0].mxu0
      %995 = vdwg.mxu0
      %996 = vmatprep.subr.mxu0 0.0
      %997 = vmatpush1.msra.mxu0 %v875
      %998 = vmatprep.subr.mxu0 0.0
      %999 = vmatpush1.msra.mxu0 %v876
      %1000 = vmatprep.subr.mxu0 0.0
      %1001 = vmatpush1.msra.mxu0 %v877
      %1002 = vmatprep.subr.mxu0 0.0
      %1003 = vmatpush1.msra.mxu0 %v878
      %1004 = vmatprep.subr.mxu0 0.0
      %1005 = vmatpush1.msra.mxu0 %v879
      %1006 = vmatprep.subr.mxu0 0.0
      %1007 = vmatpush1.msra.mxu0 %v880
      %1008 = vmatprep.subr.mxu0 0.0
      %1009 = vmatpush1.msra.mxu0 %v881
      %1010 = vmatprep.subr.mxu0 0.0
      %1011 = vmatpush1.msra.mxu0 %v882
      %1012 = vmatprep.subr.mxu0 0.0
      %1013 = vmatpush1.msra.mxu0 %v883
      %1014 = vmatprep.subr.mxu0 0.0
      %1015 = vmatpush1.msra.mxu0 %v884
      %1016 = vmatprep.subr.mxu0 0.0
      %1017 = vmatpush1.msra.mxu0 %v885
      %1018 = vmatprep.subr.mxu0 0.0
      %1019 = vmatpush1.msra.mxu0 %v886
      %1020 = vmatprep.subr.mxu0 0.0
      %1021 = vmatpush1.msra.mxu0 %v887
      %1022 = vmatprep.subr.mxu0 0.0
      %1023 = vmatpush1.msra.mxu0 %v888
      %1024 = vmatprep.subr.mxu0 0.0
      %1025 = vmatpush1.msra.mxu0 %v889
      %1026 = vmatprep.subr.mxu0 0.0
      %1027 = vmatpush1.msra.mxu0 %v890
      %1028 = vmatprep.subr.mxu0 0.0
      %1029 = vmatpush1.msra.mxu0 0.0
      %1030 = vmatprep.subr.mxu0 0.0
      %1031 = vmatpush1.msra.mxu0 0.0
      %1032 = vmatprep.subr.mxu0 0.0
      %1033 = vmatpush1.msra.mxu0 0.0
      %1034 = vmatprep.subr.mxu0 0.0
      %1035 = vmatpush1.msra.mxu0 0.0
      %1036 = vmatprep.subr.mxu0 0.0
      %1037 = vmatpush1.msra.mxu0 0.0
      %1038 = vmatprep.subr.mxu0 0.0
      %1039 = vmatpush1.msra.mxu0 0.0
      %1040 = vmatprep.subr.mxu0 0.0
      %1041 = vmatpush1.msra.mxu0 0.0
      %1042 = vmatprep.subr.mxu0 0.0
      %1043 = vmatpush1.msra.mxu0 0.0
      %1044 = vmatprep.subr.mxu0 0.0
      %1045 = vmatpush1.msra.mxu0 0.0
      %1046 = vmatprep.subr.mxu0 0.0
      %1047 = vmatpush1.msra.mxu0 0.0
      %1048 = vmatprep.subr.mxu0 0.0
      %1049 = vmatpush1.msra.mxu0 0.0
      %1050 = vmatprep.subr.mxu0 0.0
      %1051 = vmatpush1.msra.mxu0 0.0
      %1052 = vmatprep.subr.mxu0 0.0
      %1053 = vmatpush1.msra.mxu0 0.0
      %1054 = vmatprep.subr.mxu0 0.0
      %1055 = vmatpush1.msra.mxu0 0.0
      %1056 = vmatprep.subr.mxu0 0.0
      %1057 = vmatpush1.msra.mxu0 0.0
      %1058 = vmatprep.subr.mxu0 0.0
      %1059 = vmatpush1.msra.mxu0 0.0
      %1060 = vmatprep.mubr.f32.mxu0 0.0
      %1061 = vmatmul.mubr.f32.gmra.mrb[0].mxu0 %v820
      %v1062 = vpop.f32.mrb[0].mxu0
      %v1063 = vadd.f32 %v958, %v1062
      %v1064 = vpop.f32.mrb[0].mxu0
      %1065 = vmatprep.mubr.f32.mxu0 0.0
      %1066 = vmatmul.mubr.f32.gmra.mrb[0].mxu0 %v823
      %v1067 = vpop.f32.mrb[0].mxu0
      %v1068 = vadd.f32 %v963, %v1067
      %v1069 = vpop.f32.mrb[0].mxu0
      %1070 = vmatprep.mubr.f32.mxu0 0.0
      %1071 = vmatmul.mubr.f32.gmra.mrb[0].mxu0 %v826
      %v1072 = vpop.f32.mrb[0].mxu0
      %v1073 = vadd.f32 %v968, %v1072
      %v1074 = vpop.f32.mrb[0].mxu0
      %1075 = vmatprep.mubr.f32.mxu0 0.0
      %1076 = vmatmul.mubr.f32.gmra.mrb[0].mxu0 %v829
      %v1077 = vpop.f32.mrb[0].mxu0
      %v1078 = vadd.f32 %v973, %v1077
      %v1079 = vpop.f32.mrb[0].mxu0
      %1080 = vmatprep.mubr.f32.mxu0 0.0
      %1081 = vmatmul.mubr.f32.gmra.mrb[0].mxu0 %v832
      %v1082 = vpop.f32.mrb[0].mxu0
      %v1083 = vadd.f32 %v978, %v1082
      %v1084 = vpop.f32.mrb[0].mxu0
      %1085 = vmatprep.mubr.f32.mxu0 0.0
      %1086 = vmatmul.mubr.f32.gmra.mrb[0].mxu0 %v835
      %v1087 = vpop.f32.mrb[0].mxu0
      %v1088 = vadd.f32 %v983, %v1087
      %v1089 = vpop.f32.mrb[0].mxu0
      %1090 = vmatprep.mubr.f32.mxu0 0.0
      %1091 = vmatmul.mubr.f32.gmra.mrb[0].mxu0 %v838
      %v1092 = vpop.f32.mrb[0].mxu0
      %v1093 = vadd.f32 %v988, %v1092
      %v1094 = vpop.f32.mrb[0].mxu0
      %1095 = vmatprep.mubr.f32.mxu0 0.0
      %1096 = vmatmul.mubr.f32.gmra.mrb[0].mxu0 %v841
      %v1097 = vpop.f32.mrb[0].mxu0
      %v1098 = vadd.f32 %v993, %v1097
      %v1099 = vpop.f32.mrb[0].mxu0
      %1100 = vdwg.mxu0
      %1101 = vmatprep.subr.mxu0 0.0
      %1102 = vmatpush1.msra.mxu0 %v769
      %1103 = vmatprep.subr.mxu0 0.0
      %1104 = vmatpush1.msra.mxu0 %v770
      %1105 = vmatprep.subr.mxu0 0.0
      %1106 = vmatpush1.msra.mxu0 %v771
      %1107 = vmatprep.subr.mxu0 0.0
      %1108 = vmatpush1.msra.mxu0 %v772
      %1109 = vmatprep.subr.mxu0 0.0
      %1110 = vmatpush1.msra.mxu0 %v773
      %1111 = vmatprep.subr.mxu0 0.0
      %1112 = vmatpush1.msra.mxu0 %v774
      %1113 = vmatprep.subr.mxu0 0.0
      %1114 = vmatpush1.msra.mxu0 %v775
      %1115 = vmatprep.subr.mxu0 0.0
      %1116 = vmatpush1.msra.mxu0 %v776
      %1117 = vmatprep.subr.mxu0 0.0
      %1118 = vmatpush1.msra.mxu0 %v777
      %1119 = vmatprep.subr.mxu0 0.0
      %1120 = vmatpush1.msra.mxu0 %v778
      %1121 = vmatprep.subr.mxu0 0.0
      %1122 = vmatpush1.msra.mxu0 %v779
      %1123 = vmatprep.subr.mxu0 0.0
      %1124 = vmatpush1.msra.mxu0 %v780
      %1125 = vmatprep.subr.mxu0 0.0
      %1126 = vmatpush1.msra.mxu0 %v781
      %1127 = vmatprep.subr.mxu0 0.0
      %1128 = vmatpush1.msra.mxu0 %v782
      %1129 = vmatprep.subr.mxu0 0.0
      %1130 = vmatpush1.msra.mxu0 %v783
      %1131 = vmatprep.subr.mxu0 0.0
      %1132 = vmatpush1.msra.mxu0 %v784
      %1133 = vmatprep.subr.mxu0 0.0
      %1134 = vmatpush1.msra.mxu0 %v785
      %1135 = vmatprep.subr.mxu0 0.0
      %1136 = vmatpush1.msra.mxu0 %v786
      %1137 = vmatprep.subr.mxu0 0.0
      %1138 = vmatpush1.msra.mxu0 %v787
      %1139 = vmatprep.subr.mxu0 0.0
      %1140 = vmatpush1.msra.mxu0 %v788
      %1141 = vmatprep.subr.mxu0 0.0
      %1142 = vmatpush1.msra.mxu0 %v789
      %1143 = vmatprep.subr.mxu0 0.0
      %1144 = vmatpush1.msra.mxu0 %v790
      %1145 = vmatprep.subr.mxu0 0.0
      %1146 = vmatpush1.msra.mxu0 %v791
      %1147 = vmatprep.subr.mxu0 0.0
      %1148 = vmatpush1.msra.mxu0 %v792
      %1149 = vmatprep.subr.mxu0 0.0
      %1150 = vmatpush1.msra.mxu0 %v793
      %1151 = vmatprep.subr.mxu0 0.0
      %1152 = vmatpush1.msra.mxu0 %v794
      %1153 = vmatprep.subr.mxu0 0.0
      %1154 = vmatpush1.msra.mxu0 %v795
      %1155 = vmatprep.subr.mxu0 0.0
      %1156 = vmatpush1.msra.mxu0 %v796
      %1157 = vmatprep.subr.mxu0 0.0
      %1158 = vmatpush1.msra.mxu0 %v797
      %1159 = vmatprep.subr.mxu0 0.0
      %1160 = vmatpush1.msra.mxu0 %v798
      %1161 = vmatprep.subr.mxu0 0.0
      %1162 = vmatpush1.msra.mxu0 %v799
      %1163 = vmatprep.subr.mxu0 0.0
      %1164 = vmatpush1.msra.mxu0 %v800
      %1165 = vmatprep.mubr.f32.mxu0 %v746
      %1166 = vmatmul.mubr.f32.gmra.mrb[0].mxu0 %v745
      %v1167 = vpop.f32.mrb[0].mxu0
      %v1168 = vadd.f32 %v1063, %v1167
      %v1169 = vpop.f32.mrb[0].mxu0
      %1170 = vmatprep.mubr.f32.mxu0 %v749
      %1171 = vmatmul.mubr.f32.gmra.mrb[0].mxu0 %v748
      %v1172 = vpop.f32.mrb[0].mxu0
      %v1173 = vadd.f32 %v1068, %v1172
      %v1174 = vpop.f32.mrb[0].mxu0
      %1175 = vmatprep.mubr.f32.mxu0 %v752
      %1176 = vmatmul.mubr.f32.gmra.mrb[0].mxu0 %v751
      %v1177 = vpop.f32.mrb[0].mxu0
      %v1178 = vadd.f32 %v1073, %v1177
      %v1179 = vpop.f32.mrb[0].mxu0
      %1180 = vmatprep.mubr.f32.mxu0 %v755
      %1181 = vmatmul.mubr.f32.gmra.mrb[0].mxu0 %v754
      %v1182 = vpop.f32.mrb[0].mxu0
      %v1183 = vadd.f32 %v1078, %v1182
      %v1184 = vpop.f32.mrb[0].mxu0
      %1185 = vmatprep.mubr.f32.mxu0 %v758
      %1186 = vmatmul.mubr.f32.gmra.mrb[0].mxu0 %v757
      %v1187 = vpop.f32.mrb[0].mxu0
      %v1188 = vadd.f32 %v1083, %v1187
      %v1189 = vpop.f32.mrb[0].mxu0
      %1190 = vmatprep.mubr.f32.mxu0 %v761
      %1191 = vmatmul.mubr.f32.gmra.mrb[0].mxu0 %v760
      %v1192 = vpop.f32.mrb[0].mxu0
      %v1193 = vadd.f32 %v1088, %v1192
      %v1194 = vpop.f32.mrb[0].mxu0
      %1195 = vmatprep.mubr.f32.mxu0 %v764
      %1196 = vmatmul.mubr.f32.gmra.mrb[0].mxu0 %v763
      %v1197 = vpop.f32.mrb[0].mxu0
      %v1198 = vadd.f32 %v1093, %v1197
      %v1199 = vpop.f32.mrb[0].mxu0
      %1200 = vmatprep.mubr.f32.mxu0 %v767
      %1201 = vmatmul.mubr.f32.gmra.mrb[0].mxu0 %v766
      %v1202 = vpop.f32.mrb[0].mxu0
      %v1203 = vadd.f32 %v1098, %v1202
      %v1204 = vpop.f32.mrb[0].mxu0
      %1205 = vdwg.mxu0
      %1206 = vmatprep.subr.mxu0 0.0
      %1207 = vmatpush1.msra.mxu0 %v801
      %1208 = vmatprep.subr.mxu0 0.0
      %1209 = vmatpush1.msra.mxu0 %v802
      %1210 = vmatprep.subr.mxu0 0.0
      %1211 = vmatpush1.msra.mxu0 %v803
      %1212 = vmatprep.subr.mxu0 0.0
      %1213 = vmatpush1.msra.mxu0 %v804
      %1214 = vmatprep.subr.mxu0 0.0
      %1215 = vmatpush1.msra.mxu0 %v805
      %1216 = vmatprep.subr.mxu0 0.0
      %1217 = vmatpush1.msra.mxu0 %v806
      %1218 = vmatprep.subr.mxu0 0.0
      %1219 = vmatpush1.msra.mxu0 %v807
      %1220 = vmatprep.subr.mxu0 0.0
      %1221 = vmatpush1.msra.mxu0 %v808
      %1222 = vmatprep.subr.mxu0 0.0
      %1223 = vmatpush1.msra.mxu0 %v809
      %1224 = vmatprep.subr.mxu0 0.0
      %1225 = vmatpush1.msra.mxu0 %v810
      %1226 = vmatprep.subr.mxu0 0.0
      %1227 = vmatpush1.msra.mxu0 %v811
      %1228 = vmatprep.subr.mxu0 0.0
      %1229 = vmatpush1.msra.mxu0 %v812
      %1230 = vmatprep.subr.mxu0 0.0
      %1231 = vmatpush1.msra.mxu0 %v813
      %1232 = vmatprep.subr.mxu0 0.0
      %1233 = vmatpush1.msra.mxu0 %v814
      %1234 = vmatprep.subr.mxu0 0.0
      %1235 = vmatpush1.msra.mxu0 %v815
      %1236 = vmatprep.subr.mxu0 0.0
      %1237 = vmatpush1.msra.mxu0 %v816
      %1238 = vmatprep.subr.mxu0 0.0
      %1239 = vmatpush1.msra.mxu0 0.0
      %1240 = vmatprep.subr.mxu0 0.0
      %1241 = vmatpush1.msra.mxu0 0.0
      %1242 = vmatprep.subr.mxu0 0.0
      %1243 = vmatpush1.msra.mxu0 0.0
      %1244 = vmatprep.subr.mxu0 0.0
      %1245 = vmatpush1.msra.mxu0 0.0
      %1246 = vmatprep.subr.mxu0 0.0
      %1247 = vmatpush1.msra.mxu0 0.0
      %1248 = vmatprep.subr.mxu0 0.0
      %1249 = vmatpush1.msra.mxu0 0.0
      %1250 = vmatprep.subr.mxu0 0.0
      %1251 = vmatpush1.msra.mxu0 0.0
      %1252 = vmatprep.subr.mxu0 0.0
      %1253 = vmatpush1.msra.mxu0 0.0
      %1254 = vmatprep.subr.mxu0 0.0
      %1255 = vmatpush1.msra.mxu0 0.0
      %1256 = vmatprep.subr.mxu0 0.0
      %1257 = vmatpush1.msra.mxu0 0.0
      %1258 = vmatprep.subr.mxu0 0.0
      %1259 = vmatpush1.msra.mxu0 0.0
      %1260 = vmatprep.subr.mxu0 0.0
      %1261 = vmatpush1.msra.mxu0 0.0
      %1262 = vmatprep.subr.mxu0 0.0
      %1263 = vmatpush1.msra.mxu0 0.0
      %1264 = vmatprep.subr.mxu0 0.0
      %1265 = vmatpush1.msra.mxu0 0.0
      %1266 = vmatprep.subr.mxu0 0.0
      %1267 = vmatpush1.msra.mxu0 0.0
      %1268 = vmatprep.subr.mxu0 0.0
      %1269 = vmatpush1.msra.mxu0 0.0
      %1270 = vmatprep.mubr.f32.mxu0 0.0
      %1271 = vmatmul.mubr.f32.gmra.mrb[0].mxu0 %v747
      %v1272 = vpop.f32.mrb[0].mxu0
      %v1273 = vadd.f32 %v1168, %v1272
      %v1274 = vpop.f32.mrb[0].mxu0
      %1275 = vmatprep.mubr.f32.mxu0 0.0
      %1276 = vmatmul.mubr.f32.gmra.mrb[0].mxu0 %v750
      %v1277 = vpop.f32.mrb[0].mxu0
      %v1278 = vadd.f32 %v1173, %v1277
      %v1279 = vpop.f32.mrb[0].mxu0
      %1280 = vmatprep.mubr.f32.mxu0 0.0
      %1281 = vmatmul.mubr.f32.gmra.mrb[0].mxu0 %v753
      %v1282 = vpop.f32.mrb[0].mxu0
      %v1283 = vadd.f32 %v1178, %v1282
      %v1284 = vpop.f32.mrb[0].mxu0
      %1285 = vmatprep.mubr.f32.mxu0 0.0
      %1286 = vmatmul.mubr.f32.gmra.mrb[0].mxu0 %v756
      %v1287 = vpop.f32.mrb[0].mxu0
      %v1288 = vadd.f32 %v1183, %v1287
      %v1289 = vpop.f32.mrb[0].mxu0
      %1290 = vmatprep.mubr.f32.mxu0 0.0
      %1291 = vmatmul.mubr.f32.gmra.mrb[0].mxu0 %v759
      %v1292 = vpop.f32.mrb[0].mxu0
      %v1293 = vadd.f32 %v1188, %v1292
      %v1294 = vpop.f32.mrb[0].mxu0
      %1295 = vmatprep.mubr.f32.mxu0 0.0
      %1296 = vmatmul.mubr.f32.gmra.mrb[0].mxu0 %v762
      %v1297 = vpop.f32.mrb[0].mxu0
      %v1298 = vadd.f32 %v1193, %v1297
      %v1299 = vpop.f32.mrb[0].mxu0
      %1300 = vmatprep.mubr.f32.mxu0 0.0
      %1301 = vmatmul.mubr.f32.gmra.mrb[0].mxu0 %v765
      %v1302 = vpop.f32.mrb[0].mxu0
      %v1303 = vadd.f32 %v1198, %v1302
      %v1304 = vpop.f32.mrb[0].mxu0
      %1305 = vmatprep.mubr.f32.mxu0 0.0
      %1306 = vmatmul.mubr.f32.gmra.mrb[0].mxu0 %v768
      %v1307 = vpop.f32.mrb[0].mxu0
      %v1308 = vadd.f32 %v1203, %v1307
      %v1309 = vpop.f32.mrb[0].mxu0
      %1310 = vdwg.mxu0
      %s1311 = scalar_lea.vmem [#allocation3], 96
      %v1312 = vld [vmem:[%s1311] sm:$0xff]
      %v1313 = vld [vmem:[%s1311 + $0x8] sm:$0xff]
      %v1314 = vld [vmem:[%s1311 + $0x10] sm:$0xff]
      %v1315 = vld [vmem:[%s1311 + $0x18] sm:$0xff]
      %v1316 = vld [vmem:[%s1311 + $0x20] sm:$0xff]
      %v1317 = vld [vmem:[%s1311 + $0x28] sm:$0xff]
      %v1318 = vld [vmem:[%s1311 + $0x30] sm:$0xff]
      %v1319 = vld [vmem:[%s1311 + $0x38] sm:$0xff]
      %v1320 = vld [vmem:[%s1311 + $0x40] sm:$0xff]
      %v1321 = vld [vmem:[%s1311 + $0x48] sm:$0xff]
      %v1322 = vld [vmem:[%s1311 + $0x50] sm:$0xff]
      %v1323 = vld [vmem:[%s1311 + $0x58] sm:$0xff]
      %v1324 = vld [vmem:[%s1311 + $0x60] sm:$0xff]
      %v1325 = vld [vmem:[%s1311 + $0x68] sm:$0xff]
      %v1326 = vld [vmem:[%s1311 + $0x70] sm:$0xff]
      %v1327 = vld [vmem:[%s1311 + $0x78] sm:$0xff]
      %v1328 = vld [vmem:[%s1311 + $0x80] sm:$0xff]
      %v1329 = vld [vmem:[%s1311 + $0x88] sm:$0xff]
      %v1330 = vld [vmem:[%s1311 + $0x90] sm:$0xff]
      %v1331 = vld [vmem:[%s1311 + $0x98] sm:$0xff]
      %v1332 = vld [vmem:[%s1311 + $0xa0] sm:$0xff]
      %v1333 = vld [vmem:[%s1311 + $0xa8] sm:$0xff]
      %v1334 = vld [vmem:[%s1311 + $0xb0] sm:$0xff]
      %v1335 = vld [vmem:[%s1311 + $0xb8] sm:$0xff]
      %s1336 = scalar_lea.vmem %s3, 768
      %v1337 = vld [vmem:[%s1336] sm:$0xff]
      %v1338 = vld [vmem:[%s1336 + $0x8] sm:$0xff]
      %v1339 = vld [vmem:[%s1336 + $0x10] sm:$0xff]
      %v1340 = vld [vmem:[%s1336 + $0x18] sm:$0xff]
      %v1341 = vld [vmem:[%s1336 + $0x20] sm:$0xff]
      %v1342 = vld [vmem:[%s1336 + $0x28] sm:$0xff]
      %v1343 = vld [vmem:[%s1336 + $0x30] sm:$0xff]
      %v1344 = vld [vmem:[%s1336 + $0x38] sm:$0xff]
      %v1345 = vld [vmem:[%s1336 + $0x40] sm:$0xff]
      %v1346 = vld [vmem:[%s1336 + $0x48] sm:$0xff]
      %v1347 = vld [vmem:[%s1336 + $0x50] sm:$0xff]
      %v1348 = vld [vmem:[%s1336 + $0x58] sm:$0xff]
      %v1349 = vld [vmem:[%s1336 + $0x60] sm:$0xff]
      %v1350 = vld [vmem:[%s1336 + $0x68] sm:$0xff]
      %v1351 = vld [vmem:[%s1336 + $0x70] sm:$0xff]
      %v1352 = vld [vmem:[%s1336 + $0x78] sm:$0xff]
      %v1353 = vld [vmem:[%s1336 + $0x80] sm:$0xff]
      %v1354 = vld [vmem:[%s1336 + $0x88] sm:$0xff]
      %v1355 = vld [vmem:[%s1336 + $0x90] sm:$0xff]
      %v1356 = vld [vmem:[%s1336 + $0x98] sm:$0xff]
      %v1357 = vld [vmem:[%s1336 + $0xa0] sm:$0xff]
      %v1358 = vld [vmem:[%s1336 + $0xa8] sm:$0xff]
      %v1359 = vld [vmem:[%s1336 + $0xb0] sm:$0xff]
      %v1360 = vld [vmem:[%s1336 + $0xb8] sm:$0xff]
      %v1361 = vld [vmem:[%s1336 + $0xc0] sm:$0xff]
      %v1362 = vld [vmem:[%s1336 + $0xc8] sm:$0xff]
      %v1363 = vld [vmem:[%s1336 + $0xd0] sm:$0xff]
      %v1364 = vld [vmem:[%s1336 + $0xd8] sm:$0xff]
      %v1365 = vld [vmem:[%s1336 + $0xe0] sm:$0xff]
      %v1366 = vld [vmem:[%s1336 + $0xe8] sm:$0xff]
      %v1367 = vld [vmem:[%s1336 + $0xf0] sm:$0xff]
      %v1368 = vld [vmem:[%s1336 + $0xf8] sm:$0xff]
      %v1369 = vld [vmem:[%s1336 + $0x100] sm:$0xff]
      %v1370 = vld [vmem:[%s1336 + $0x108] sm:$0xff]
      %v1371 = vld [vmem:[%s1336 + $0x110] sm:$0xff]
      %v1372 = vld [vmem:[%s1336 + $0x118] sm:$0xff]
      %v1373 = vld [vmem:[%s1336 + $0x120] sm:$0xff]
      %v1374 = vld [vmem:[%s1336 + $0x128] sm:$0xff]
      %v1375 = vld [vmem:[%s1336 + $0x130] sm:$0xff]
      %v1376 = vld [vmem:[%s1336 + $0x138] sm:$0xff]
      %v1377 = vld [vmem:[%s1336 + $0x140] sm:$0xff]
      %v1378 = vld [vmem:[%s1336 + $0x148] sm:$0xff]
      %v1379 = vld [vmem:[%s1336 + $0x150] sm:$0xff]
      %v1380 = vld [vmem:[%s1336 + $0x158] sm:$0xff]
      %v1381 = vld [vmem:[%s1336 + $0x160] sm:$0xff]
      %v1382 = vld [vmem:[%s1336 + $0x168] sm:$0xff]
      %v1383 = vld [vmem:[%s1336 + $0x170] sm:$0xff]
      %v1384 = vld [vmem:[%s1336 + $0x178] sm:$0xff]
      %1385 = vmatprep.subr.mxu0 0.0
      %1386 = vmatpush1.msra.mxu0 %v1337
      %1387 = vmatprep.subr.mxu0 0.0
      %1388 = vmatpush1.msra.mxu0 %v1338
      %1389 = vmatprep.subr.mxu0 0.0
      %1390 = vmatpush1.msra.mxu0 %v1339
      %1391 = vmatprep.subr.mxu0 0.0
      %1392 = vmatpush1.msra.mxu0 %v1340
      %1393 = vmatprep.subr.mxu0 0.0
      %1394 = vmatpush1.msra.mxu0 %v1341
      %1395 = vmatprep.subr.mxu0 0.0
      %1396 = vmatpush1.msra.mxu0 %v1342
      %1397 = vmatprep.subr.mxu0 0.0
      %1398 = vmatpush1.msra.mxu0 %v1343
      %1399 = vmatprep.subr.mxu0 0.0
      %1400 = vmatpush1.msra.mxu0 %v1344
      %1401 = vmatprep.subr.mxu0 0.0
      %1402 = vmatpush1.msra.mxu0 %v1345
      %1403 = vmatprep.subr.mxu0 0.0
      %1404 = vmatpush1.msra.mxu0 %v1346
      %1405 = vmatprep.subr.mxu0 0.0
      %1406 = vmatpush1.msra.mxu0 %v1347
      %1407 = vmatprep.subr.mxu0 0.0
      %1408 = vmatpush1.msra.mxu0 %v1348
      %1409 = vmatprep.subr.mxu0 0.0
      %1410 = vmatpush1.msra.mxu0 %v1349
      %1411 = vmatprep.subr.mxu0 0.0
      %1412 = vmatpush1.msra.mxu0 %v1350
      %1413 = vmatprep.subr.mxu0 0.0
      %1414 = vmatpush1.msra.mxu0 %v1351
      %1415 = vmatprep.subr.mxu0 0.0
      %1416 = vmatpush1.msra.mxu0 %v1352
      %1417 = vmatprep.subr.mxu0 0.0
      %1418 = vmatpush1.msra.mxu0 %v1353
      %1419 = vmatprep.subr.mxu0 0.0
      %1420 = vmatpush1.msra.mxu0 %v1354
      %1421 = vmatprep.subr.mxu0 0.0
      %1422 = vmatpush1.msra.mxu0 %v1355
      %1423 = vmatprep.subr.mxu0 0.0
      %1424 = vmatpush1.msra.mxu0 %v1356
      %1425 = vmatprep.subr.mxu0 0.0
      %1426 = vmatpush1.msra.mxu0 %v1357
      %1427 = vmatprep.subr.mxu0 0.0
      %1428 = vmatpush1.msra.mxu0 %v1358
      %1429 = vmatprep.subr.mxu0 0.0
      %1430 = vmatpush1.msra.mxu0 %v1359
      %1431 = vmatprep.subr.mxu0 0.0
      %1432 = vmatpush1.msra.mxu0 %v1360
      %1433 = vmatprep.subr.mxu0 0.0
      %1434 = vmatpush1.msra.mxu0 %v1361
      %1435 = vmatprep.subr.mxu0 0.0
      %1436 = vmatpush1.msra.mxu0 %v1362
      %1437 = vmatprep.subr.mxu0 0.0
      %1438 = vmatpush1.msra.mxu0 %v1363
      %1439 = vmatprep.subr.mxu0 0.0
      %1440 = vmatpush1.msra.mxu0 %v1364
      %1441 = vmatprep.subr.mxu0 0.0
      %1442 = vmatpush1.msra.mxu0 %v1365
      %1443 = vmatprep.subr.mxu0 0.0
      %1444 = vmatpush1.msra.mxu0 %v1366
      %1445 = vmatprep.subr.mxu0 0.0
      %1446 = vmatpush1.msra.mxu0 %v1367
      %1447 = vmatprep.subr.mxu0 0.0
      %1448 = vmatpush1.msra.mxu0 %v1368
      %1449 = vmatprep.mubr.f32.mxu0 %v1313
      %1450 = vmatmul.mubr.f32.gmra.mrb[0].mxu0 %v1312
      %v1451 = vpop.f32.mrb[0].mxu0
      %v1452 = vadd.f32 0.0, %v1451
      %v1453 = vpop.f32.mrb[0].mxu0
      %1454 = vmatprep.mubr.f32.mxu0 %v1316
      %1455 = vmatmul.mubr.f32.gmra.mrb[0].mxu0 %v1315
      %v1456 = vpop.f32.mrb[0].mxu0
      %v1457 = vadd.f32 0.0, %v1456
      %v1458 = vpop.f32.mrb[0].mxu0
      %1459 = vmatprep.mubr.f32.mxu0 %v1319
      %1460 = vmatmul.mubr.f32.gmra.mrb[0].mxu0 %v1318
      %v1461 = vpop.f32.mrb[0].mxu0
      %v1462 = vadd.f32 0.0, %v1461
      %v1463 = vpop.f32.mrb[0].mxu0
      %1464 = vmatprep.mubr.f32.mxu0 %v1322
      %1465 = vmatmul.mubr.f32.gmra.mrb[0].mxu0 %v1321
      %v1466 = vpop.f32.mrb[0].mxu0
      %v1467 = vadd.f32 0.0, %v1466
      %v1468 = vpop.f32.mrb[0].mxu0
      %1469 = vmatprep.mubr.f32.mxu0 %v1325
      %1470 = vmatmul.mubr.f32.gmra.mrb[0].mxu0 %v1324
      %v1471 = vpop.f32.mrb[0].mxu0
      %v1472 = vadd.f32 0.0, %v1471
      %v1473 = vpop.f32.mrb[0].mxu0
      %1474 = vmatprep.mubr.f32.mxu0 %v1328
      %1475 = vmatmul.mubr.f32.gmra.mrb[0].mxu0 %v1327
      %v1476 = vpop.f32.mrb[0].mxu0
      %v1477 = vadd.f32 0.0, %v1476
      %v1478 = vpop.f32.mrb[0].mxu0
      %1479 = vmatprep.mubr.f32.mxu0 %v1331
      %1480 = vmatmul.mubr.f32.gmra.mrb[0].mxu0 %v1330
      %v1481 = vpop.f32.mrb[0].mxu0
      %v1482 = vadd.f32 0.0, %v1481
      %v1483 = vpop.f32.mrb[0].mxu0
      %1484 = vmatprep.mubr.f32.mxu0 %v1334
      %1485 = vmatmul.mubr.f32.gmra.mrb[0].mxu0 %v1333
      %v1486 = vpop.f32.mrb[0].mxu0
      %v1487 = vadd.f32 0.0, %v1486
      %v1488 = vpop.f32.mrb[0].mxu0
      %1489 = vdwg.mxu0
      %1490 = vmatprep.subr.mxu0 0.0
      %1491 = vmatpush1.msra.mxu0 %v1369
      %1492 = vmatprep.subr.mxu0 0.0
      %1493 = vmatpush1.msra.mxu0 %v1370
      %1494 = vmatprep.subr.mxu0 0.0
      %1495 = vmatpush1.msra.mxu0 %v1371
      %1496 = vmatprep.subr.mxu0 0.0
      %1497 = vmatpush1.msra.mxu0 %v1372
      %1498 = vmatprep.subr.mxu0 0.0
      %1499 = vmatpush1.msra.mxu0 %v1373
      %1500 = vmatprep.subr.mxu0 0.0
      %1501 = vmatpush1.msra.mxu0 %v1374
      %1502 = vmatprep.subr.mxu0 0.0
      %1503 = vmatpush1.msra.mxu0 %v1375
      %1504 = vmatprep.subr.mxu0 0.0
      %1505 = vmatpush1.msra.mxu0 %v1376
      %1506 = vmatprep.subr.mxu0 0.0
      %1507 = vmatpush1.msra.mxu0 %v1377
      %1508 = vmatprep.subr.mxu0 0.0
      %1509 = vmatpush1.msra.mxu0 %v1378
      %1510 = vmatprep.subr.mxu0 0.0
      %1511 = vmatpush1.msra.mxu0 %v1379
      %1512 = vmatprep.subr.mxu0 0.0
      %1513 = vmatpush1.msra.mxu0 %v1380
      %1514 = vmatprep.subr.mxu0 0.0
      %1515 = vmatpush1.msra.mxu0 %v1381
      %1516 = vmatprep.subr.mxu0 0.0
      %1517 = vmatpush1.msra.mxu0 %v1382
      %1518 = vmatprep.subr.mxu0 0.0
      %1519 = vmatpush1.msra.mxu0 %v1383
      %1520 = vmatprep.subr.mxu0 0.0
      %1521 = vmatpush1.msra.mxu0 %v1384
      %1522 = vmatprep.subr.mxu0 0.0
      %1523 = vmatpush1.msra.mxu0 0.0
      %1524 = vmatprep.subr.mxu0 0.0
      %1525 = vmatpush1.msra.mxu0 0.0
      %1526 = vmatprep.subr.mxu0 0.0
      %1527 = vmatpush1.msra.mxu0 0.0
      %1528 = vmatprep.subr.mxu0 0.0
      %1529 = vmatpush1.msra.mxu0 0.0
      %1530 = vmatprep.subr.mxu0 0.0
      %1531 = vmatpush1.msra.mxu0 0.0
      %1532 = vmatprep.subr.mxu0 0.0
      %1533 = vmatpush1.msra.mxu0 0.0
      %1534 = vmatprep.subr.mxu0 0.0
      %1535 = vmatpush1.msra.mxu0 0.0
      %1536 = vmatprep.subr.mxu0 0.0
      %1537 = vmatpush1.msra.mxu0 0.0
      %1538 = vmatprep.subr.mxu0 0.0
      %1539 = vmatpush1.msra.mxu0 0.0
      %1540 = vmatprep.subr.mxu0 0.0
      %1541 = vmatpush1.msra.mxu0 0.0
      %1542 = vmatprep.subr.mxu0 0.0
      %1543 = vmatpush1.msra.mxu0 0.0
      %1544 = vmatprep.subr.mxu0 0.0
      %1545 = vmatpush1.msra.mxu0 0.0
      %1546 = vmatprep.subr.mxu0 0.0
      %1547 = vmatpush1.msra.mxu0 0.0
      %1548 = vmatprep.subr.mxu0 0.0
      %1549 = vmatpush1.msra.mxu0 0.0
      %1550 = vmatprep.subr.mxu0 0.0
      %1551 = vmatpush1.msra.mxu0 0.0
      %1552 = vmatprep.subr.mxu0 0.0
      %1553 = vmatpush1.msra.mxu0 0.0
      %1554 = vmatprep.mubr.f32.mxu0 0.0
      %1555 = vmatmul.mubr.f32.gmra.mrb[0].mxu0 %v1314
      %v1556 = vpop.f32.mrb[0].mxu0
      %v1557 = vadd.f32 %v1452, %v1556
      %v1558 = vpop.f32.mrb[0].mxu0
      %1559 = vmatprep.mubr.f32.mxu0 0.0
      %1560 = vmatmul.mubr.f32.gmra.mrb[0].mxu0 %v1317
      %v1561 = vpop.f32.mrb[0].mxu0
      %v1562 = vadd.f32 %v1457, %v1561
      %v1563 = vpop.f32.mrb[0].mxu0
      %1564 = vmatprep.mubr.f32.mxu0 0.0
      %1565 = vmatmul.mubr.f32.gmra.mrb[0].mxu0 %v1320
      %v1566 = vpop.f32.mrb[0].mxu0
      %v1567 = vadd.f32 %v1462, %v1566
      %v1568 = vpop.f32.mrb[0].mxu0
      %1569 = vmatprep.mubr.f32.mxu0 0.0
      %1570 = vmatmul.mubr.f32.gmra.mrb[0].mxu0 %v1323
      %v1571 = vpop.f32.mrb[0].mxu0
      %v1572 = vadd.f32 %v1467, %v1571
      %v1573 = vpop.f32.mrb[0].mxu0
      %1574 = vmatprep.mubr.f32.mxu0 0.0
      %1575 = vmatmul.mubr.f32.gmra.mrb[0].mxu0 %v1326
      %v1576 = vpop.f32.mrb[0].mxu0
      %v1577 = vadd.f32 %v1472, %v1576
      %v1578 = vpop.f32.mrb[0].mxu0
      %1579 = vmatprep.mubr.f32.mxu0 0.0
      %1580 = vmatmul.mubr.f32.gmra.mrb[0].mxu0 %v1329
      %v1581 = vpop.f32.mrb[0].mxu0
      %v1582 = vadd.f32 %v1477, %v1581
      %v1583 = vpop.f32.mrb[0].mxu0
      %1584 = vmatprep.mubr.f32.mxu0 0.0
      %1585 = vmatmul.mubr.f32.gmra.mrb[0].mxu0 %v1332
      %v1586 = vpop.f32.mrb[0].mxu0
      %v1587 = vadd.f32 %v1482, %v1586
      %v1588 = vpop.f32.mrb[0].mxu0
      %1589 = vmatprep.mubr.f32.mxu0 0.0
      %1590 = vmatmul.mubr.f32.gmra.mrb[0].mxu0 %v1335
      %v1591 = vpop.f32.mrb[0].mxu0
      %v1592 = vadd.f32 %v1487, %v1591
      %v1593 = vpop.f32.mrb[0].mxu0
      %1594 = vdwg.mxu0
      %v1595 = vadd.f32 %v1273, %v1557
      %v1596 = vadd.f32 %v1278, %v1562
      %v1597 = vadd.f32 %v1283, %v1567
      %v1598 = vadd.f32 %v1288, %v1572
      %v1599 = vadd.f32 %v1293, %v1577
      %v1600 = vadd.f32 %v1298, %v1582
      %v1601 = vadd.f32 %v1303, %v1587
      %v1602 = vadd.f32 %v1308, %v1592
      %v1603 = vld [vmem:[%s4] sm:$0x1]
      %v1605 = vlaneseq
      %v1606 = vshrl.u32 %v1605, 7
      %v1607 = vsub.s32 0, %v1606
      %v1608 = vrot.slane %v1603, %v1607
      %v1610 = vadd.f32 %v1595, %v1608
      %v1611 = vadd.f32 %v1596, %v1608
      %v1612 = vadd.f32 %v1597, %v1608
      %v1613 = vadd.f32 %v1598, %v1608
      %v1614 = vadd.f32 %v1599, %v1608
      %v1615 = vadd.f32 %v1600, %v1608
      %v1616 = vadd.f32 %v1601, %v1608
      %v1617 = vadd.f32 %v1602, %v1608
      %v1618 = vmax.f32 %v1610, 0.0
      %v1619 = vmax.f32 %v1611, 0.0
      %v1620 = vmax.f32 %v1612, 0.0
      %v1621 = vmax.f32 %v1613, 0.0
      %v1622 = vmax.f32 %v1614, 0.0
      %v1623 = vmax.f32 %v1615, 0.0
      %v1624 = vmax.f32 %v1616, 0.0
      %v1625 = vmax.f32 %v1617, 0.0
      %v1626 = vld [vmem:[%s5] sm:$0xff]
      %v1627 = vld [vmem:[%s5 + $0x8] sm:$0xff]
      %v1628 = vld [vmem:[%s5 + $0x10] sm:$0xff]
      %v1629 = vld [vmem:[%s5 + $0x18] sm:$0xff]
      %v1630 = vld [vmem:[%s5 + $0x20] sm:$0xff]
      %v1631 = vld [vmem:[%s5 + $0x28] sm:$0xff]
      %v1632 = vld [vmem:[%s5 + $0x30] sm:$0xff]
      %v1633 = vld [vmem:[%s5 + $0x38] sm:$0xff]
      %v1634 = vld [vmem:[%s5 + $0x40] sm:$0xff]
      %v1635 = vld [vmem:[%s5 + $0x48] sm:$0xff]
      %v1636 = vld [vmem:[%s5 + $0x50] sm:$0xff]
      %v1637 = vld [vmem:[%s5 + $0x58] sm:$0xff]
      %v1638 = vld [vmem:[%s5 + $0x60] sm:$0xff]
      %v1639 = vld [vmem:[%s5 + $0x68] sm:$0xff]
      %v1640 = vld [vmem:[%s5 + $0x70] sm:$0xff]
      %v1641 = vld [vmem:[%s5 + $0x78] sm:$0xff]
      %v1642 = vld [vmem:[%s6] sm:$0x1]
      %v1644 = vlaneseq
      %v1645 = vshrl.u32 %v1644, 7
      %v1646 = vsub.s32 0, %v1645
      %v1647 = vrot.slane %v1642, %v1646
      %1649 = vmatprep.subr.mxu0 0.0
      %1650 = vmatpush1.msra.mxu0 %v1626
      %1651 = vmatprep.subr.mxu0 0.0
      %1652 = vmatpush1.msra.mxu0 %v1627
      %1653 = vmatprep.subr.mxu0 0.0
      %1654 = vmatpush1.msra.mxu0 %v1628
      %1655 = vmatprep.subr.mxu0 0.0
      %1656 = vmatpush1.msra.mxu0 %v1629
      %1657 = vmatprep.subr.mxu0 0.0
      %1658 = vmatpush1.msra.mxu0 %v1630
      %1659 = vmatprep.subr.mxu0 0.0
      %1660 = vmatpush1.msra.mxu0 %v1631
      %1661 = vmatprep.subr.mxu0 0.0
      %1662 = vmatpush1.msra.mxu0 %v1632
      %1663 = vmatprep.subr.mxu0 0.0
      %1664 = vmatpush1.msra.mxu0 %v1633
      %1665 = vmatprep.subr.mxu0 0.0
      %1666 = vmatpush1.msra.mxu0 %v1634
      %1667 = vmatprep.subr.mxu0 0.0
      %1668 = vmatpush1.msra.mxu0 %v1635
      %1669 = vmatprep.subr.mxu0 0.0
      %1670 = vmatpush1.msra.mxu0 %v1636
      %1671 = vmatprep.subr.mxu0 0.0
      %1672 = vmatpush1.msra.mxu0 %v1637
      %1673 = vmatprep.subr.mxu0 0.0
      %1674 = vmatpush1.msra.mxu0 %v1638
      %1675 = vmatprep.subr.mxu0 0.0
      %1676 = vmatpush1.msra.mxu0 %v1639
      %1677 = vmatprep.subr.mxu0 0.0
      %1678 = vmatpush1.msra.mxu0 %v1640
      %1679 = vmatprep.subr.mxu0 0.0
      %1680 = vmatpush1.msra.mxu0 %v1641
      %1681 = vmatprep.subr.mxu0 0.0
      %1682 = vmatpush1.msra.mxu0 0.0
      %1683 = vmatprep.subr.mxu0 0.0
      %1684 = vmatpush1.msra.mxu0 0.0
      %1685 = vmatprep.subr.mxu0 0.0
      %1686 = vmatpush1.msra.mxu0 0.0
      %1687 = vmatprep.subr.mxu0 0.0
      %1688 = vmatpush1.msra.mxu0 0.0
      %1689 = vmatprep.subr.mxu0 0.0
      %1690 = vmatpush1.msra.mxu0 0.0
      %1691 = vmatprep.subr.mxu0 0.0
      %1692 = vmatpush1.msra.mxu0 0.0
      %1693 = vmatprep.subr.mxu0 0.0
      %1694 = vmatpush1.msra.mxu0 0.0
      %1695 = vmatprep.subr.mxu0 0.0
      %1696 = vmatpush1.msra.mxu0 0.0
      %1697 = vmatprep.subr.mxu0 0.0
      %1698 = vmatpush1.msra.mxu0 0.0
      %1699 = vmatprep.subr.mxu0 0.0
      %1700 = vmatpush1.msra.mxu0 0.0
      %1701 = vmatprep.subr.mxu0 0.0
      %1702 = vmatpush1.msra.mxu0 0.0
      %1703 = vmatprep.subr.mxu0 0.0
      %1704 = vmatpush1.msra.mxu0 0.0
      %1705 = vmatprep.subr.mxu0 0.0
      %1706 = vmatpush1.msra.mxu0 0.0
      %1707 = vmatprep.subr.mxu0 0.0
      %1708 = vmatpush1.msra.mxu0 0.0
      %1709 = vmatprep.subr.mxu0 0.0
      %1710 = vmatpush1.msra.mxu0 0.0
      %1711 = vmatprep.subr.mxu0 0.0
      %1712 = vmatpush1.msra.mxu0 0.0
      %1713 = vmatprep.mubr.f32.mxu0 0.0
      %1714 = vmatmul.mubr.f32.gmra.mrb[0].mxu0 %v1618
      %v1715 = vpop.f32.mrb[0].mxu0
      %v1716 = vadd.f32 %v1647, %v1715
      %v1717 = vpop.f32.mrb[0].mxu0
      %1718 = vmatprep.mubr.f32.mxu0 0.0
      %1719 = vmatmul.mubr.f32.gmra.mrb[0].mxu0 %v1619
      %v1720 = vpop.f32.mrb[0].mxu0
      %v1721 = vadd.f32 %v1647, %v1720
      %v1722 = vpop.f32.mrb[0].mxu0
      %1723 = vmatprep.mubr.f32.mxu0 0.0
      %1724 = vmatmul.mubr.f32.gmra.mrb[0].mxu0 %v1620
      %v1725 = vpop.f32.mrb[0].mxu0
      %v1726 = vadd.f32 %v1647, %v1725
      %v1727 = vpop.f32.mrb[0].mxu0
      %1728 = vmatprep.mubr.f32.mxu0 0.0
      %1729 = vmatmul.mubr.f32.gmra.mrb[0].mxu0 %v1621
      %v1730 = vpop.f32.mrb[0].mxu0
      %v1731 = vadd.f32 %v1647, %v1730
      %v1732 = vpop.f32.mrb[0].mxu0
      %1733 = vmatprep.mubr.f32.mxu0 0.0
      %1734 = vmatmul.mubr.f32.gmra.mrb[0].mxu0 %v1622
      %v1735 = vpop.f32.mrb[0].mxu0
      %v1736 = vadd.f32 %v1647, %v1735
      %v1737 = vpop.f32.mrb[0].mxu0
      %1738 = vmatprep.mubr.f32.mxu0 0.0
      %1739 = vmatmul.mubr.f32.gmra.mrb[0].mxu0 %v1623
      %v1740 = vpop.f32.mrb[0].mxu0
      %v1741 = vadd.f32 %v1647, %v1740
      %v1742 = vpop.f32.mrb[0].mxu0
      %1743 = vmatprep.mubr.f32.mxu0 0.0
      %1744 = vmatmul.mubr.f32.gmra.mrb[0].mxu0 %v1624
      %v1745 = vpop.f32.mrb[0].mxu0
      %v1746 = vadd.f32 %v1647, %v1745
      %v1747 = vpop.f32.mrb[0].mxu0
      %1748 = vmatprep.mubr.f32.mxu0 0.0
      %1749 = vmatmul.mubr.f32.gmra.mrb[0].mxu0 %v1625
      %v1750 = vpop.f32.mrb[0].mxu0
      %v1751 = vadd.f32 %v1647, %v1750
      %v1752 = vpop.f32.mrb[0].mxu0
      %1753 = vdwg.mxu0
      %v1754 = vadd.f32 %v1716, %v430
      %v1755 = vadd.f32 %v1721, %v431
      %v1756 = vadd.f32 %v1726, %v432
      %v1757 = vadd.f32 %v1731, %v433
      %v1758 = vadd.f32 %v1736, %v434
      %v1759 = vadd.f32 %v1741, %v435
      %v1760 = vadd.f32 %v1746, %v436
      %v1761 = vadd.f32 %v1751, %v437
      %v1762 = vmax.f32 %v1754, 0.0
      %v1763 = vmax.f32 %v1755, 0.0
      %v1764 = vmax.f32 %v1756, 0.0
      %v1765 = vmax.f32 %v1757, 0.0
      %v1766 = vmax.f32 %v1758, 0.0
      %v1767 = vmax.f32 %v1759, 0.0
      %v1768 = vmax.f32 %v1760, 0.0
      %v1769 = vmax.f32 %v1761, 0.0
      %1770 = vst [vmem:[%s256] sm:$0xff] %v1762
      %1771 = vst [vmem:[%s256 + $0x8] sm:$0xff] %v1763
      %1772 = vst [vmem:[%s256 + $0x10] sm:$0xff] %v1764
      %1773 = vst [vmem:[%s256 + $0x18] sm:$0xff] %v1765
      %1774 = vst [vmem:[%s256 + $0x20] sm:$0xff] %v1766
      %1775 = vst [vmem:[%s256 + $0x28] sm:$0xff] %v1767
      %1776 = vst [vmem:[%s256 + $0x30] sm:$0xff] %v1768
      %1777 = vst [vmem:[%s256 + $0x38] sm:$0xff] %v1769
      %s1778 = smul.u32 4, %s23
      %p1779 = scmp.lt.s32.totalorder %s22, 1
      %s1780 = scalar_select %p1779, %s22, 1
      %p1781 = scmp.lt.s32.totalorder %s1778, 15
      %s1782 = scalar_select %p1781, %s1778, 15
      %s1783 = smul.addr %s1782, 2
      %s1784 = smul.addr %s1780, 32
      %s1785 = sadd.s32 %s1783, %s1784
      %s1786 = smul.addr %s1785, 8
      %s1787 = scalar_lea.vmem %s7, %s1786
      // Predicated region
      $region133: #{bottleneck_forward.1} parent=43 // pred_check
        %p1788 = pneg %p176
      $region134: #{bottleneck_forward.1} parent=43 // pred_check_branch
        %1790 = sbr.rel (%p1788) target = $region136
      $region135: #{bottleneck_forward.1} parent=43 // pred_region
        %s1791 = smul.u32 4, %s23
      $region136: #{bottleneck_forward.1} parent=43 // pred_fallthru
        _
    $region44: #{bottleneck_forward.1} parent=5 // pred_fallthru
      _
    %p1792 = scmp.le.s32.totalorder 2, %s13
    // Predicated region
    $region137: #{bottleneck_forward.1} parent=5 // pred_check
      %p1793 = pneg %p1792
    $region138: #{bottleneck_forward.1} parent=5 // pred_check_branch
      %1795 = sbr.rel (%p1793) target = $region140
    $region139: #{bottleneck_forward.1} parent=5 // pred_region
      %s1796 = ssub.s32 %s13, 2
      // Predicated region
      $region141: #{bottleneck_forward.1} parent=139 // pred_check
        %p1797 = pneg %p182
      $region142: #{bottleneck_forward.1} parent=139 // pred_check_branch
        %1799 = sbr.rel (%p1797) target = $region144
      $region143: #{bottleneck_forward.1} parent=139 // pred_region
        %s1800 = smul.u32 4, %s25
        %p1801 = scmp.lt.s32.totalorder %s24, 1
        %s1802 = scalar_select %p1801, %s24, 1
        %p1803 = scmp.lt.s32.totalorder %s1800, 15
        %s1804 = scalar_select %p1803, %s1800, 15
        %s1805 = smul.addr %s1804, 2
        %s1806 = smul.addr %s1802, 32
        %s1807 = sadd.s32 %s1805, %s1806
        %s1808 = smul.addr %s1807, 8
        %s1809 = scalar_lea.vmem %s7, %s1808
      $region144: #{bottleneck_forward.1} parent=139 // pred_fallthru
        _
    $region140: #{bottleneck_forward.1} parent=5 // pred_fallthru
      _
  $region6: #{bottleneck_forward.1} parent=0 // loop_footer
    %s17 = sadd.s32 1, %s13
  $region7: #{bottleneck_forward.1} parent=0 // loop_footer_branch
    %12 = sbr.rel target = $region3
  $region8: #{bottleneck_forward.1} parent=0 // loop_exit
    _
  %1810 = vsyncmov [#allocation4]
  %s1811 = vpop.sfrf %1810
  %p1812 = scmp.eq.s32.totalorder %s1811, 0
  %p1813 = pneg %p1812
  %1815 = shalt.err (%p1813)
  %s1816 = scalar_lea.sflag [#allocation4], 1
  %1817 = vsyncmov %s1816
  %s1818 = vpop.sfrf %1817
  %p1819 = scmp.eq.s32.totalorder %s1818, 0
  %p1820 = pneg %p1819
  %1822 = shalt.err (%p1820)

</llo_original>
